<compile_context>
chip_gen: v5e
topology: v5e:2x2
jax: 0.10.0
libtpu: 0.0.40
codegen_flags: <defaults>
</compile_context>

<pallas_src>
import functools

import jax
import jax.numpy as jnp
from jax.experimental import pallas as pl
from jax.experimental.pallas import tpu as pltpu  # noqa: F401


def _round_up(n, m):
    return ((n + m - 1) // m) * m


# ---------------------------------------------------------------------------
# Single fused kernel: all LSTM layers + the Linear head.
# ---------------------------------------------------------------------------
def make_fused_kernel(layer_hidden, seq_len, b_pad):
    """Build a kernel for a fixed stack configuration.

    Kernel refs (in order):
      x_ref:                (T*Bp, F0)       time-major flattened input
      per layer li:         wih (F, 4H), whh (H, 4H), bias (1, 4H)
      wbig_ref:             (T*C, L*C)       expanded Linear-head weight
      bbig_ref:             (1, L*C)         expanded Linear-head bias
      o_ref:                (Bp, L*C)        fused output slab
    """
    num_layers = len(layer_hidden)

    def kernel(*refs):
        x_ref = refs[0]
        w_refs = refs[1:1 + 3 * num_layers]
        wbig_ref = refs[1 + 3 * num_layers]
        bbig_ref = refs[2 + 3 * num_layers]
        o_ref = refs[3 + 3 * num_layers]

        cur = x_ref[...].astype(jnp.float32)          # (T*Bp, F) layer input
        hs = None
        for li in range(num_layers):
            hidden = layer_hidden[li]
            wih = w_refs[3 * li][...]                 # (F, 4H)
            whh = w_refs[3 * li + 1][...]             # (H, 4H)
            bias = w_refs[3 * li + 2][...]            # (1, 4H)

            # Hoisted input projection for ALL timesteps: one MXU GEMM.
            gates_x = jnp.dot(cur, wih,
                              preferred_element_type=jnp.float32) + bias

            # Strictly sequential recurrence (small static T, fully unrolled).
            h = jnp.zeros((b_pad, hidden), jnp.float32)
            c = jnp.zeros((b_pad, hidden), jnp.float32)
            hs = []
            for t in range(seq_len):
                g = gates_x[t * b_pad:(t + 1) * b_pad, :] + jnp.dot(
                    h, whh, preferred_element_type=jnp.float32)
                # Two whole-vreg EUP pushes instead of four fragmented ones.
                sig = jax.nn.sigmoid(g)               # (Bp, 4H)
                th = jnp.tanh(g)                      # (Bp, 4H)
                i_g = sig[:, 0 * hidden:1 * hidden]
                f_g = sig[:, 1 * hidden:2 * hidden]
                g_g = th[:, 2 * hidden:3 * hidden]
                o_g = sig[:, 3 * hidden:4 * hidden]
                c = f_g * c + i_g * g_g
                h = o_g * jnp.tanh(c)
                hs.append(h)

            if li + 1 < num_layers:
                # Next layer's time-major flattened input stays in vregs/VMEM.
                cur = jnp.concatenate(hs, axis=0)     # (T*Bp, H)

        # Linear head, fully off the serial chain: one MXU dot.
        # hseq[b, t*C + c] = h_t[b, c]
        hseq = jnp.concatenate(hs, axis=1)            # (Bp, T*C)
        out = jnp.dot(hseq, wbig_ref[...],
                      preferred_element_type=jnp.float32)  # (Bp, L*C)
        o_ref[...] = (out + bbig_ref[...]).astype(o_ref.dtype)

    return kernel


# ---------------------------------------------------------------------------
# Parameter init (mimics torch's U(-1/sqrt(H), 1/sqrt(H)), torch layouts).
# ---------------------------------------------------------------------------
def init_params(key, node_num, input_len, input_channel, hidden_sizes,
                output_len, output_channel):
    params = {"lstm": []}
    prev = node_num * input_channel
    all_hidden = list(hidden_sizes) + [node_num * output_channel]
    for hs in all_hidden:
        key, k1, k2, k3, k4 = jax.random.split(key, 5)
        bound = 1.0 / jnp.sqrt(hs)
        w_ih = jax.random.uniform(k1, (4 * hs, prev), jnp.float32, -bound, bound)
        w_hh = jax.random.uniform(k2, (4 * hs, hs), jnp.float32, -bound, bound)
        b_ih = jax.random.uniform(k3, (4 * hs,), jnp.float32, -bound, bound)
        b_hh = jax.random.uniform(k4, (4 * hs,), jnp.float32, -bound, bound)
        params["lstm"].append((w_ih, w_hh, b_ih, b_hh))
        prev = hs
    key, k1, k2 = jax.random.split(key, 3)
    bound = 1.0 / jnp.sqrt(input_len)
    params["mlp_w"] = jax.random.uniform(
        k1, (output_len, input_len), jnp.float32, -bound, bound)
    params["mlp_b"] = jax.random.uniform(
        k2, (output_len,), jnp.float32, -bound, bound)
    return params


def prepare_kernel_params(params):
    """One-time layout prep: transpose weights, fold biases, expand the head.

    Done once (outside the forward) so the forward emits no layout XLA ops.
    """
    kp = {"layers": []}
    for (w_ih, w_hh, b_ih, b_hh) in params["lstm"]:
        kp["layers"].append((
            jnp.asarray(w_ih).T,                         # (F, 4H)
            jnp.asarray(w_hh).T,                         # (H, 4H)
            (b_ih + b_hh).reshape(1, -1),                # (1, 4H)
        ))
    chan = params["lstm"][-1][1].shape[0] // 4           # last-layer hidden C
    out_len, seq_len = params["mlp_w"].shape
    eye = jnp.eye(chan, dtype=jnp.float32)
    # w_big[t*C + c, l*C + c'] = mlp_w[l, t] * (c == c')
    kp["w_big"] = jnp.einsum("lt,cd->tcld", params["mlp_w"],
                             eye).reshape(seq_len * chan, out_len * chan)
    kp["b_big"] = jnp.repeat(params["mlp_b"], chan).reshape(1, out_len * chan)
    return kp


# ---------------------------------------------------------------------------
# Forward pass: tiny layout glue in plain JAX, one fused Pallas kernel.
# ---------------------------------------------------------------------------
def lstm_forward(kparams, x, output_channel):
    # x: (B, T, node_num, input_channel)
    batch, seq_len = x.shape[0], x.shape[1]
    feat0 = x.shape[2] * x.shape[3]
    b_pad = _round_up(batch, 8)                      # sublane-aligned batch

    h = x.reshape(batch, seq_len, feat0)
    h = jnp.transpose(h, (1, 0, 2))                  # (T, B, F) seq-first (tiny)
    if b_pad != batch:
        h = jnp.pad(h, ((0, 0), (0, b_pad - batch), (0, 0)))
    x2d = h.reshape(seq_len * b_pad, feat0).astype(jnp.float32)

    layer_hidden = tuple(int(whh.shape[0]) for (_, whh, _) in kparams["layers"])
    chan = layer_hidden[-1]
    out_len = kparams["b_big"].shape[1] // chan

    flat_w = []
    for (wih_t, whh_t, bias2) in kparams["layers"]:
        flat_w += [wih_t, whh_t, bias2]
    args = [x2d] + flat_w + [kparams["w_big"], kparams["b_big"]]

    kernel = make_fused_kernel(layer_hidden, seq_len, b_pad)
    out = pl.pallas_call(
        kernel,
        out_shape=jax.ShapeDtypeStruct((b_pad, out_len * chan), jnp.float32),
        in_specs=[pl.BlockSpec(a.shape, lambda: (0, 0)) for a in args],
        out_specs=pl.BlockSpec((b_pad, out_len * chan), lambda: (0, 0)),
    )(*args)

    # (Bp, L*C) -> (B, L, node_num, output_channel): slice + reshape only.
    return out[:batch].reshape(batch, out_len, -1, output_channel)


# Pure-JAX reference of the same math (for a sanity check).
def _ref_forward(params, x, output_channel):
    B, T = x.shape[0], x.shape[1]
    h = jnp.transpose(x.reshape(B, T, -1), (1, 0, 2))
    for (w_ih, w_hh, b_ih, b_hh) in params["lstm"]:
        H = w_hh.shape[1]

        def step(carry, x_t, w_ih=w_ih, w_hh=w_hh, b_ih=b_ih, b_hh=b_hh, H=H):
            hh, cc = carry
            g = x_t @ w_ih.T + hh @ w_hh.T + b_ih + b_hh
            i = jax.nn.sigmoid(g[:, 0 * H:1 * H])
            f = jax.nn.sigmoid(g[:, 1 * H:2 * H])
            gg = jnp.tanh(g[:, 2 * H:3 * H])
            o = jax.nn.sigmoid(g[:, 3 * H:4 * H])
            cc = f * cc + i * gg
            hh = o * jnp.tanh(cc)
            return (hh, cc), hh

        init = (jnp.zeros((B, H), jnp.float32), jnp.zeros((B, H), jnp.float32))
        _, h = jax.lax.scan(step, init, h)
    y = jnp.transpose(h, (1, 2, 0)) @ params["mlp_w"].T + params["mlp_b"]
    y = jnp.transpose(y, (0, 2, 1))
    return y.reshape(y.shape[0], y.shape[1], -1, output_channel)


if __name__ == "__main__":
    # Small deterministic configuration.
    node_num = 4
    input_len = 8          # T (sequence length)
    input_channel = 4
    hidden_sizes = [32]
    output_len = 4
    output_channel = 2
    batch = 2

    key = jax.random.PRNGKey(0)
    pkey, xkey = jax.random.split(key)
    params = init_params(pkey, node_num, input_len, input_channel,
                         hidden_sizes, output_len, output_channel)
    kparams = prepare_kernel_params(params)

    x = jax.random.normal(
        xkey, (batch, input_len, node_num, input_channel), jnp.float32)

    fwd = jax.jit(functools.partial(lstm_forward, output_channel=output_channel))
    y = fwd(kparams, x)
    y = jax.block_until_ready(y)

    assert y.shape == (batch, output_len, node_num, output_channel), y.shape

    y_ref = _ref_forward(params, x, output_channel)
    assert jnp.allclose(y, y_ref, atol=1e-3, rtol=1e-3), (
        float(jnp.max(jnp.abs(y - y_ref))))

    print("KERNEL_OK")
</pallas_src>

<mosaic_0001>
module attributes {stable_mosaic.version = 11 : i64} {
  func.func @kernel(%arg0: memref<64x16xf32, #tpu.memory_space<vmem>>, %arg1: memref<16x128xf32, #tpu.memory_space<vmem>>, %arg2: memref<32x128xf32, #tpu.memory_space<vmem>>, %arg3: memref<1x128xf32, #tpu.memory_space<vmem>>, %arg4: memref<32x32xf32, #tpu.memory_space<vmem>>, %arg5: memref<8x32xf32, #tpu.memory_space<vmem>>, %arg6: memref<1x32xf32, #tpu.memory_space<vmem>>, %arg7: memref<64x32xf32, #tpu.memory_space<vmem>>, %arg8: memref<1x32xf32, #tpu.memory_space<vmem>>, %arg9: memref<8x32xf32, #tpu.memory_space<vmem>>) attributes {dimension_semantics = [], scalar_prefetch = 0 : i64, scratch_operands = 0 : i64, tpu.core_type = #tpu.core_type<tc>} {
    %c0 = arith.constant 0 : index
    %c0_0 = arith.constant 0 : index
    %0 = vector.load %arg0[%c0, %c0_0] : memref<64x16xf32, #tpu.memory_space<vmem>>, vector<64x16xf32>
    %c0_1 = arith.constant 0 : index
    %c0_2 = arith.constant 0 : index
    %1 = vector.load %arg1[%c0_1, %c0_2] : memref<16x128xf32, #tpu.memory_space<vmem>>, vector<16x128xf32>
    %c0_3 = arith.constant 0 : index
    %c0_4 = arith.constant 0 : index
    %2 = vector.load %arg2[%c0_3, %c0_4] : memref<32x128xf32, #tpu.memory_space<vmem>>, vector<32x128xf32>
    %c0_5 = arith.constant 0 : index
    %c0_6 = arith.constant 0 : index
    %3 = vector.load %arg3[%c0_5, %c0_6] : memref<1x128xf32, #tpu.memory_space<vmem>>, vector<1x128xf32>
    %cst = arith.constant dense<0.000000e+00> : vector<64x128xf32>
    %4 = tpu.matmul %0, %1, %cst {dimension_numbers = #tpu.dot_dimension_numbers<[1], [0], [0], [1], [0, 0, 1, 1], [], []>} : vector<64x16xf32>, vector<16x128xf32>, vector<64x128xf32> -> vector<64x128xf32>
    %5 = vector.broadcast %3 : vector<1x128xf32> to vector<64x128xf32>
    %6 = arith.addf %4, %5 : vector<64x128xf32>
    %cst_7 = arith.constant 0.000000e+00 : f32
    %7 = vector.broadcast %cst_7 : f32 to vector<8x32xf32>
    %cst_8 = arith.constant 0.000000e+00 : f32
    %8 = vector.broadcast %cst_8 : f32 to vector<8x32xf32>
    %9 = vector.extract_strided_slice %6 {offsets = [0, 0], sizes = [8, 128], strides = [1, 1]} : vector<64x128xf32> to vector<8x128xf32>
    %cst_9 = arith.constant dense<0.000000e+00> : vector<8x128xf32>
    %10 = tpu.matmul %7, %2, %cst_9 {dimension_numbers = #tpu.dot_dimension_numbers<[1], [0], [0], [1], [0, 0, 1, 1], [], []>} : vector<8x32xf32>, vector<32x128xf32>, vector<8x128xf32> -> vector<8x128xf32>
    %11 = arith.addf %9, %10 : vector<8x128xf32>
    %12 = arith.negf %11 : vector<8x128xf32>
    %13 = math.exp %12 : vector<8x128xf32>
    %cst_10 = arith.constant 1.000000e+00 : f32
    %14 = vector.broadcast %cst_10 : f32 to vector<8x128xf32>
    %15 = arith.addf %14, %13 : vector<8x128xf32>
    %16 = arith.divf %14, %15 : vector<8x128xf32>
    %17 = math.tanh %11 : vector<8x128xf32>
    %18 = vector.extract_strided_slice %16 {offsets = [0, 0], sizes = [8, 32], strides = [1, 1]} : vector<8x128xf32> to vector<8x32xf32>
    %19 = vector.extract_strided_slice %16 {offsets = [0, 32], sizes = [8, 32], strides = [1, 1]} : vector<8x128xf32> to vector<8x32xf32>
    %20 = vector.extract_strided_slice %17 {offsets = [0, 64], sizes = [8, 32], strides = [1, 1]} : vector<8x128xf32> to vector<8x32xf32>
    %21 = vector.extract_strided_slice %16 {offsets = [0, 96], sizes = [8, 32], strides = [1, 1]} : vector<8x128xf32> to vector<8x32xf32>
    %22 = arith.mulf %19, %8 : vector<8x32xf32>
    %23 = arith.mulf %18, %20 : vector<8x32xf32>
    %24 = arith.addf %22, %23 : vector<8x32xf32>
    %25 = math.tanh %24 : vector<8x32xf32>
    %26 = arith.mulf %21, %25 : vector<8x32xf32>
    %27 = vector.extract_strided_slice %6 {offsets = [8, 0], sizes = [8, 128], strides = [1, 1]} : vector<64x128xf32> to vector<8x128xf32>
    %cst_11 = arith.constant dense<0.000000e+00> : vector<8x128xf32>
    %28 = tpu.matmul %26, %2, %cst_11 {dimension_numbers = #tpu.dot_dimension_numbers<[1], [0], [0], [1], [0, 0, 1, 1], [], []>} : vector<8x32xf32>, vector<32x128xf32>, vector<8x128xf32> -> vector<8x128xf32>
    %29 = arith.addf %27, %28 : vector<8x128xf32>
    %30 = arith.negf %29 : vector<8x128xf32>
    %31 = math.exp %30 : vector<8x128xf32>
    %cst_12 = arith.constant 1.000000e+00 : f32
    %32 = vector.broadcast %cst_12 : f32 to vector<8x128xf32>
    %33 = arith.addf %32, %31 : vector<8x128xf32>
    %34 = arith.divf %32, %33 : vector<8x128xf32>
    %35 = math.tanh %29 : vector<8x128xf32>
    %36 = vector.extract_strided_slice %34 {offsets = [0, 0], sizes = [8, 32], strides = [1, 1]} : vector<8x128xf32> to vector<8x32xf32>
    %37 = vector.extract_strided_slice %34 {offsets = [0, 32], sizes = [8, 32], strides = [1, 1]} : vector<8x128xf32> to vector<8x32xf32>
    %38 = vector.extract_strided_slice %35 {offsets = [0, 64], sizes = [8, 32], strides = [1, 1]} : vector<8x128xf32> to vector<8x32xf32>
    %39 = vector.extract_strided_slice %34 {offsets = [0, 96], sizes = [8, 32], strides = [1, 1]} : vector<8x128xf32> to vector<8x32xf32>
    %40 = arith.mulf %37, %24 : vector<8x32xf32>
    %41 = arith.mulf %36, %38 : vector<8x32xf32>
    %42 = arith.addf %40, %41 : vector<8x32xf32>
    %43 = math.tanh %42 : vector<8x32xf32>
    %44 = arith.mulf %39, %43 : vector<8x32xf32>
    %45 = vector.extract_strided_slice %6 {offsets = [16, 0], sizes = [8, 128], strides = [1, 1]} : vector<64x128xf32> to vector<8x128xf32>
    %cst_13 = arith.constant dense<0.000000e+00> : vector<8x128xf32>
    %46 = tpu.matmul %44, %2, %cst_13 {dimension_numbers = #tpu.dot_dimension_numbers<[1], [0], [0], [1], [0, 0, 1, 1], [], []>} : vector<8x32xf32>, vector<32x128xf32>, vector<8x128xf32> -> vector<8x128xf32>
    %47 = arith.addf %45, %46 : vector<8x128xf32>
    %48 = arith.negf %47 : vector<8x128xf32>
    %49 = math.exp %48 : vector<8x128xf32>
    %cst_14 = arith.constant 1.000000e+00 : f32
    %50 = vector.broadcast %cst_14 : f32 to vector<8x128xf32>
    %51 = arith.addf %50, %49 : vector<8x128xf32>
    %52 = arith.divf %50, %51 : vector<8x128xf32>
    %53 = math.tanh %47 : vector<8x128xf32>
    %54 = vector.extract_strided_slice %52 {offsets = [0, 0], sizes = [8, 32], strides = [1, 1]} : vector<8x128xf32> to vector<8x32xf32>
    %55 = vector.extract_strided_slice %52 {offsets = [0, 32], sizes = [8, 32], strides = [1, 1]} : vector<8x128xf32> to vector<8x32xf32>
    %56 = vector.extract_strided_slice %53 {offsets = [0, 64], sizes = [8, 32], strides = [1, 1]} : vector<8x128xf32> to vector<8x32xf32>
    %57 = vector.extract_strided_slice %52 {offsets = [0, 96], sizes = [8, 32], strides = [1, 1]} : vector<8x128xf32> to vector<8x32xf32>
    %58 = arith.mulf %55, %42 : vector<8x32xf32>
    %59 = arith.mulf %54, %56 : vector<8x32xf32>
    %60 = arith.addf %58, %59 : vector<8x32xf32>
    %61 = math.tanh %60 : vector<8x32xf32>
    %62 = arith.mulf %57, %61 : vector<8x32xf32>
    %63 = vector.extract_strided_slice %6 {offsets = [24, 0], sizes = [8, 128], strides = [1, 1]} : vector<64x128xf32> to vector<8x128xf32>
    %cst_15 = arith.constant dense<0.000000e+00> : vector<8x128xf32>
    %64 = tpu.matmul %62, %2, %cst_15 {dimension_numbers = #tpu.dot_dimension_numbers<[1], [0], [0], [1], [0, 0, 1, 1], [], []>} : vector<8x32xf32>, vector<32x128xf32>, vector<8x128xf32> -> vector<8x128xf32>
    %65 = arith.addf %63, %64 : vector<8x128xf32>
    %66 = arith.negf %65 : vector<8x128xf32>
    %67 = math.exp %66 : vector<8x128xf32>
    %cst_16 = arith.constant 1.000000e+00 : f32
    %68 = vector.broadcast %cst_16 : f32 to vector<8x128xf32>
    %69 = arith.addf %68, %67 : vector<8x128xf32>
    %70 = arith.divf %68, %69 : vector<8x128xf32>
    %71 = math.tanh %65 : vector<8x128xf32>
    %72 = vector.extract_strided_slice %70 {offsets = [0, 0], sizes = [8, 32], strides = [1, 1]} : vector<8x128xf32> to vector<8x32xf32>
    %73 = vector.extract_strided_slice %70 {offsets = [0, 32], sizes = [8, 32], strides = [1, 1]} : vector<8x128xf32> to vector<8x32xf32>
    %74 = vector.extract_strided_slice %71 {offsets = [0, 64], sizes = [8, 32], strides = [1, 1]} : vector<8x128xf32> to vector<8x32xf32>
    %75 = vector.extract_strided_slice %70 {offsets = [0, 96], sizes = [8, 32], strides = [1, 1]} : vector<8x128xf32> to vector<8x32xf32>
    %76 = arith.mulf %73, %60 : vector<8x32xf32>
    %77 = arith.mulf %72, %74 : vector<8x32xf32>
    %78 = arith.addf %76, %77 : vector<8x32xf32>
    %79 = math.tanh %78 : vector<8x32xf32>
    %80 = arith.mulf %75, %79 : vector<8x32xf32>
    %81 = vector.extract_strided_slice %6 {offsets = [32, 0], sizes = [8, 128], strides = [1, 1]} : vector<64x128xf32> to vector<8x128xf32>
    %cst_17 = arith.constant dense<0.000000e+00> : vector<8x128xf32>
    %82 = tpu.matmul %80, %2, %cst_17 {dimension_numbers = #tpu.dot_dimension_numbers<[1], [0], [0], [1], [0, 0, 1, 1], [], []>} : vector<8x32xf32>, vector<32x128xf32>, vector<8x128xf32> -> vector<8x128xf32>
    %83 = arith.addf %81, %82 : vector<8x128xf32>
    %84 = arith.negf %83 : vector<8x128xf32>
    %85 = math.exp %84 : vector<8x128xf32>
    %cst_18 = arith.constant 1.000000e+00 : f32
    %86 = vector.broadcast %cst_18 : f32 to vector<8x128xf32>
    %87 = arith.addf %86, %85 : vector<8x128xf32>
    %88 = arith.divf %86, %87 : vector<8x128xf32>
    %89 = math.tanh %83 : vector<8x128xf32>
    %90 = vector.extract_strided_slice %88 {offsets = [0, 0], sizes = [8, 32], strides = [1, 1]} : vector<8x128xf32> to vector<8x32xf32>
    %91 = vector.extract_strided_slice %88 {offsets = [0, 32], sizes = [8, 32], strides = [1, 1]} : vector<8x128xf32> to vector<8x32xf32>
    %92 = vector.extract_strided_slice %89 {offsets = [0, 64], sizes = [8, 32], strides = [1, 1]} : vector<8x128xf32> to vector<8x32xf32>
    %93 = vector.extract_strided_slice %88 {offsets = [0, 96], sizes = [8, 32], strides = [1, 1]} : vector<8x128xf32> to vector<8x32xf32>
    %94 = arith.mulf %91, %78 : vector<8x32xf32>
    %95 = arith.mulf %90, %92 : vector<8x32xf32>
    %96 = arith.addf %94, %95 : vector<8x32xf32>
    %97 = math.tanh %96 : vector<8x32xf32>
    %98 = arith.mulf %93, %97 : vector<8x32xf32>
    %99 = vector.extract_strided_slice %6 {offsets = [40, 0], sizes = [8, 128], strides = [1, 1]} : vector<64x128xf32> to vector<8x128xf32>
    %cst_19 = arith.constant dense<0.000000e+00> : vector<8x128xf32>
    %100 = tpu.matmul %98, %2, %cst_19 {dimension_numbers = #tpu.dot_dimension_numbers<[1], [0], [0], [1], [0, 0, 1, 1], [], []>} : vector<8x32xf32>, vector<32x128xf32>, vector<8x128xf32> -> vector<8x128xf32>
    %101 = arith.addf %99, %100 : vector<8x128xf32>
    %102 = arith.negf %101 : vector<8x128xf32>
    %103 = math.exp %102 : vector<8x128xf32>
    %cst_20 = arith.constant 1.000000e+00 : f32
    %104 = vector.broadcast %cst_20 : f32 to vector<8x128xf32>
    %105 = arith.addf %104, %103 : vector<8x128xf32>
    %106 = arith.divf %104, %105 : vector<8x128xf32>
    %107 = math.tanh %101 : vector<8x128xf32>
    %108 = vector.extract_strided_slice %106 {offsets = [0, 0], sizes = [8, 32], strides = [1, 1]} : vector<8x128xf32> to vector<8x32xf32>
    %109 = vector.extract_strided_slice %106 {offsets = [0, 32], sizes = [8, 32], strides = [1, 1]} : vector<8x128xf32> to vector<8x32xf32>
    %110 = vector.extract_strided_slice %107 {offsets = [0, 64], sizes = [8, 32], strides = [1, 1]} : vector<8x128xf32> to vector<8x32xf32>
    %111 = vector.extract_strided_slice %106 {offsets = [0, 96], sizes = [8, 32], strides = [1, 1]} : vector<8x128xf32> to vector<8x32xf32>
    %112 = arith.mulf %109, %96 : vector<8x32xf32>
    %113 = arith.mulf %108, %110 : vector<8x32xf32>
    %114 = arith.addf %112, %113 : vector<8x32xf32>
    %115 = math.tanh %114 : vector<8x32xf32>
    %116 = arith.mulf %111, %115 : vector<8x32xf32>
    %117 = vector.extract_strided_slice %6 {offsets = [48, 0], sizes = [8, 128], strides = [1, 1]} : vector<64x128xf32> to vector<8x128xf32>
    %cst_21 = arith.constant dense<0.000000e+00> : vector<8x128xf32>
    %118 = tpu.matmul %116, %2, %cst_21 {dimension_numbers = #tpu.dot_dimension_numbers<[1], [0], [0], [1], [0, 0, 1, 1], [], []>} : vector<8x32xf32>, vector<32x128xf32>, vector<8x128xf32> -> vector<8x128xf32>
    %119 = arith.addf %117, %118 : vector<8x128xf32>
    %120 = arith.negf %119 : vector<8x128xf32>
    %121 = math.exp %120 : vector<8x128xf32>
    %cst_22 = arith.constant 1.000000e+00 : f32
    %122 = vector.broadcast %cst_22 : f32 to vector<8x128xf32>
    %123 = arith.addf %122, %121 : vector<8x128xf32>
    %124 = arith.divf %122, %123 : vector<8x128xf32>
    %125 = math.tanh %119 : vector<8x128xf32>
    %126 = vector.extract_strided_slice %124 {offsets = [0, 0], sizes = [8, 32], strides = [1, 1]} : vector<8x128xf32> to vector<8x32xf32>
    %127 = vector.extract_strided_slice %124 {offsets = [0, 32], sizes = [8, 32], strides = [1, 1]} : vector<8x128xf32> to vector<8x32xf32>
    %128 = vector.extract_strided_slice %125 {offsets = [0, 64], sizes = [8, 32], strides = [1, 1]} : vector<8x128xf32> to vector<8x32xf32>
    %129 = vector.extract_strided_slice %124 {offsets = [0, 96], sizes = [8, 32], strides = [1, 1]} : vector<8x128xf32> to vector<8x32xf32>
    %130 = arith.mulf %127, %114 : vector<8x32xf32>
    %131 = arith.mulf %126, %128 : vector<8x32xf32>
    %132 = arith.addf %130, %131 : vector<8x32xf32>
    %133 = math.tanh %132 : vector<8x32xf32>
    %134 = arith.mulf %129, %133 : vector<8x32xf32>
    %135 = vector.extract_strided_slice %6 {offsets = [56, 0], sizes = [8, 128], strides = [1, 1]} : vector<64x128xf32> to vector<8x128xf32>
    %cst_23 = arith.constant dense<0.000000e+00> : vector<8x128xf32>
    %136 = tpu.matmul %134, %2, %cst_23 {dimension_numbers = #tpu.dot_dimension_numbers<[1], [0], [0], [1], [0, 0, 1, 1], [], []>} : vector<8x32xf32>, vector<32x128xf32>, vector<8x128xf32> -> vector<8x128xf32>
    %137 = arith.addf %135, %136 : vector<8x128xf32>
    %138 = arith.negf %137 : vector<8x128xf32>
    %139 = math.exp %138 : vector<8x128xf32>
    %cst_24 = arith.constant 1.000000e+00 : f32
    %140 = vector.broadcast %cst_24 : f32 to vector<8x128xf32>
    %141 = arith.addf %140, %139 : vector<8x128xf32>
    %142 = arith.divf %140, %141 : vector<8x128xf32>
    %143 = math.tanh %137 : vector<8x128xf32>
    %144 = vector.extract_strided_slice %142 {offsets = [0, 0], sizes = [8, 32], strides = [1, 1]} : vector<8x128xf32> to vector<8x32xf32>
    %145 = vector.extract_strided_slice %142 {offsets = [0, 32], sizes = [8, 32], strides = [1, 1]} : vector<8x128xf32> to vector<8x32xf32>
    %146 = vector.extract_strided_slice %143 {offsets = [0, 64], sizes = [8, 32], strides = [1, 1]} : vector<8x128xf32> to vector<8x32xf32>
    %147 = vector.extract_strided_slice %142 {offsets = [0, 96], sizes = [8, 32], strides = [1, 1]} : vector<8x128xf32> to vector<8x32xf32>
    %148 = arith.mulf %145, %132 : vector<8x32xf32>
    %149 = arith.mulf %144, %146 : vector<8x32xf32>
    %150 = arith.addf %148, %149 : vector<8x32xf32>
    %151 = math.tanh %150 : vector<8x32xf32>
    %152 = arith.mulf %147, %151 : vector<8x32xf32>
    %153 = tpu.concatenate %26, %44, %62, %80, %98, %116, %134, %152 in 0 : vector<8x32xf32>, vector<8x32xf32>, vector<8x32xf32>, vector<8x32xf32>, vector<8x32xf32>, vector<8x32xf32>, vector<8x32xf32>, vector<8x32xf32> -> vector<64x32xf32>
    %c0_25 = arith.constant 0 : index
    %c0_26 = arith.constant 0 : index
    %154 = vector.load %arg4[%c0_25, %c0_26] : memref<32x32xf32, #tpu.memory_space<vmem>>, vector<32x32xf32>
    %c0_27 = arith.constant 0 : index
    %c0_28 = arith.constant 0 : index
    %155 = vector.load %arg5[%c0_27, %c0_28] : memref<8x32xf32, #tpu.memory_space<vmem>>, vector<8x32xf32>
    %c0_29 = arith.constant 0 : index
    %c0_30 = arith.constant 0 : index
    %156 = vector.load %arg6[%c0_29, %c0_30] : memref<1x32xf32, #tpu.memory_space<vmem>>, vector<1x32xf32>
    %cst_31 = arith.constant dense<0.000000e+00> : vector<64x32xf32>
    %157 = tpu.matmul %153, %154, %cst_31 {dimension_numbers = #tpu.dot_dimension_numbers<[1], [0], [0], [1], [0, 0, 1, 1], [], []>} : vector<64x32xf32>, vector<32x32xf32>, vector<64x32xf32> -> vector<64x32xf32>
    %158 = vector.broadcast %156 : vector<1x32xf32> to vector<64x32xf32>
    %159 = arith.addf %157, %158 : vector<64x32xf32>
    %cst_32 = arith.constant 0.000000e+00 : f32
    %160 = vector.broadcast %cst_32 : f32 to vector<8x8xf32>
    %cst_33 = arith.constant 0.000000e+00 : f32
    %161 = vector.broadcast %cst_33 : f32 to vector<8x8xf32>
    %162 = vector.extract_strided_slice %159 {offsets = [0, 0], sizes = [8, 32], strides = [1, 1]} : vector<64x32xf32> to vector<8x32xf32>
    %cst_34 = arith.constant dense<0.000000e+00> : vector<8x32xf32>
    %163 = tpu.matmul %160, %155, %cst_34 {dimension_numbers = #tpu.dot_dimension_numbers<[1], [0], [0], [1], [0, 0, 1, 1], [], []>} : vector<8x8xf32>, vector<8x32xf32>, vector<8x32xf32> -> vector<8x32xf32>
    %164 = arith.addf %162, %163 : vector<8x32xf32>
    %165 = arith.negf %164 : vector<8x32xf32>
    %166 = math.exp %165 : vector<8x32xf32>
    %cst_35 = arith.constant 1.000000e+00 : f32
    %167 = vector.broadcast %cst_35 : f32 to vector<8x32xf32>
    %168 = arith.addf %167, %166 : vector<8x32xf32>
    %169 = arith.divf %167, %168 : vector<8x32xf32>
    %170 = math.tanh %164 : vector<8x32xf32>
    %171 = vector.extract_strided_slice %169 {offsets = [0, 0], sizes = [8, 8], strides = [1, 1]} : vector<8x32xf32> to vector<8x8xf32>
    %172 = vector.extract_strided_slice %169 {offsets = [0, 8], sizes = [8, 8], strides = [1, 1]} : vector<8x32xf32> to vector<8x8xf32>
    %173 = vector.extract_strided_slice %170 {offsets = [0, 16], sizes = [8, 8], strides = [1, 1]} : vector<8x32xf32> to vector<8x8xf32>
    %174 = vector.extract_strided_slice %169 {offsets = [0, 24], sizes = [8, 8], strides = [1, 1]} : vector<8x32xf32> to vector<8x8xf32>
    %175 = arith.mulf %172, %161 : vector<8x8xf32>
    %176 = arith.mulf %171, %173 : vector<8x8xf32>
    %177 = arith.addf %175, %176 : vector<8x8xf32>
    %178 = math.tanh %177 : vector<8x8xf32>
    %179 = arith.mulf %174, %178 : vector<8x8xf32>
    %180 = vector.extract_strided_slice %159 {offsets = [8, 0], sizes = [8, 32], strides = [1, 1]} : vector<64x32xf32> to vector<8x32xf32>
    %cst_36 = arith.constant dense<0.000000e+00> : vector<8x32xf32>
    %181 = tpu.matmul %179, %155, %cst_36 {dimension_numbers = #tpu.dot_dimension_numbers<[1], [0], [0], [1], [0, 0, 1, 1], [], []>} : vector<8x8xf32>, vector<8x32xf32>, vector<8x32xf32> -> vector<8x32xf32>
    %182 = arith.addf %180, %181 : vector<8x32xf32>
    %183 = arith.negf %182 : vector<8x32xf32>
    %184 = math.exp %183 : vector<8x32xf32>
    %cst_37 = arith.constant 1.000000e+00 : f32
    %185 = vector.broadcast %cst_37 : f32 to vector<8x32xf32>
    %186 = arith.addf %185, %184 : vector<8x32xf32>
    %187 = arith.divf %185, %186 : vector<8x32xf32>
    %188 = math.tanh %182 : vector<8x32xf32>
    %189 = vector.extract_strided_slice %187 {offsets = [0, 0], sizes = [8, 8], strides = [1, 1]} : vector<8x32xf32> to vector<8x8xf32>
    %190 = vector.extract_strided_slice %187 {offsets = [0, 8], sizes = [8, 8], strides = [1, 1]} : vector<8x32xf32> to vector<8x8xf32>
    %191 = vector.extract_strided_slice %188 {offsets = [0, 16], sizes = [8, 8], strides = [1, 1]} : vector<8x32xf32> to vector<8x8xf32>
    %192 = vector.extract_strided_slice %187 {offsets = [0, 24], sizes = [8, 8], strides = [1, 1]} : vector<8x32xf32> to vector<8x8xf32>
    %193 = arith.mulf %190, %177 : vector<8x8xf32>
    %194 = arith.mulf %189, %191 : vector<8x8xf32>
    %195 = arith.addf %193, %194 : vector<8x8xf32>
    %196 = math.tanh %195 : vector<8x8xf32>
    %197 = arith.mulf %192, %196 : vector<8x8xf32>
    %198 = vector.extract_strided_slice %159 {offsets = [16, 0], sizes = [8, 32], strides = [1, 1]} : vector<64x32xf32> to vector<8x32xf32>
    %cst_38 = arith.constant dense<0.000000e+00> : vector<8x32xf32>
    %199 = tpu.matmul %197, %155, %cst_38 {dimension_numbers = #tpu.dot_dimension_numbers<[1], [0], [0], [1], [0, 0, 1, 1], [], []>} : vector<8x8xf32>, vector<8x32xf32>, vector<8x32xf32> -> vector<8x32xf32>
    %200 = arith.addf %198, %199 : vector<8x32xf32>
    %201 = arith.negf %200 : vector<8x32xf32>
    %202 = math.exp %201 : vector<8x32xf32>
    %cst_39 = arith.constant 1.000000e+00 : f32
    %203 = vector.broadcast %cst_39 : f32 to vector<8x32xf32>
    %204 = arith.addf %203, %202 : vector<8x32xf32>
    %205 = arith.divf %203, %204 : vector<8x32xf32>
    %206 = math.tanh %200 : vector<8x32xf32>
    %207 = vector.extract_strided_slice %205 {offsets = [0, 0], sizes = [8, 8], strides = [1, 1]} : vector<8x32xf32> to vector<8x8xf32>
    %208 = vector.extract_strided_slice %205 {offsets = [0, 8], sizes = [8, 8], strides = [1, 1]} : vector<8x32xf32> to vector<8x8xf32>
    %209 = vector.extract_strided_slice %206 {offsets = [0, 16], sizes = [8, 8], strides = [1, 1]} : vector<8x32xf32> to vector<8x8xf32>
    %210 = vector.extract_strided_slice %205 {offsets = [0, 24], sizes = [8, 8], strides = [1, 1]} : vector<8x32xf32> to vector<8x8xf32>
    %211 = arith.mulf %208, %195 : vector<8x8xf32>
    %212 = arith.mulf %207, %209 : vector<8x8xf32>
    %213 = arith.addf %211, %212 : vector<8x8xf32>
    %214 = math.tanh %213 : vector<8x8xf32>
    %215 = arith.mulf %210, %214 : vector<8x8xf32>
    %216 = vector.extract_strided_slice %159 {offsets = [24, 0], sizes = [8, 32], strides = [1, 1]} : vector<64x32xf32> to vector<8x32xf32>
    %cst_40 = arith.constant dense<0.000000e+00> : vector<8x32xf32>
    %217 = tpu.matmul %215, %155, %cst_40 {dimension_numbers = #tpu.dot_dimension_numbers<[1], [0], [0], [1], [0, 0, 1, 1], [], []>} : vector<8x8xf32>, vector<8x32xf32>, vector<8x32xf32> -> vector<8x32xf32>
    %218 = arith.addf %216, %217 : vector<8x32xf32>
    %219 = arith.negf %218 : vector<8x32xf32>
    %220 = math.exp %219 : vector<8x32xf32>
    %cst_41 = arith.constant 1.000000e+00 : f32
    %221 = vector.broadcast %cst_41 : f32 to vector<8x32xf32>
    %222 = arith.addf %221, %220 : vector<8x32xf32>
    %223 = arith.divf %221, %222 : vector<8x32xf32>
    %224 = math.tanh %218 : vector<8x32xf32>
    %225 = vector.extract_strided_slice %223 {offsets = [0, 0], sizes = [8, 8], strides = [1, 1]} : vector<8x32xf32> to vector<8x8xf32>
    %226 = vector.extract_strided_slice %223 {offsets = [0, 8], sizes = [8, 8], strides = [1, 1]} : vector<8x32xf32> to vector<8x8xf32>
    %227 = vector.extract_strided_slice %224 {offsets = [0, 16], sizes = [8, 8], strides = [1, 1]} : vector<8x32xf32> to vector<8x8xf32>
    %228 = vector.extract_strided_slice %223 {offsets = [0, 24], sizes = [8, 8], strides = [1, 1]} : vector<8x32xf32> to vector<8x8xf32>
    %229 = arith.mulf %226, %213 : vector<8x8xf32>
    %230 = arith.mulf %225, %227 : vector<8x8xf32>
    %231 = arith.addf %229, %230 : vector<8x8xf32>
    %232 = math.tanh %231 : vector<8x8xf32>
    %233 = arith.mulf %228, %232 : vector<8x8xf32>
    %234 = vector.extract_strided_slice %159 {offsets = [32, 0], sizes = [8, 32], strides = [1, 1]} : vector<64x32xf32> to vector<8x32xf32>
    %cst_42 = arith.constant dense<0.000000e+00> : vector<8x32xf32>
    %235 = tpu.matmul %233, %155, %cst_42 {dimension_numbers = #tpu.dot_dimension_numbers<[1], [0], [0], [1], [0, 0, 1, 1], [], []>} : vector<8x8xf32>, vector<8x32xf32>, vector<8x32xf32> -> vector<8x32xf32>
    %236 = arith.addf %234, %235 : vector<8x32xf32>
    %237 = arith.negf %236 : vector<8x32xf32>
    %238 = math.exp %237 : vector<8x32xf32>
    %cst_43 = arith.constant 1.000000e+00 : f32
    %239 = vector.broadcast %cst_43 : f32 to vector<8x32xf32>
    %240 = arith.addf %239, %238 : vector<8x32xf32>
    %241 = arith.divf %239, %240 : vector<8x32xf32>
    %242 = math.tanh %236 : vector<8x32xf32>
    %243 = vector.extract_strided_slice %241 {offsets = [0, 0], sizes = [8, 8], strides = [1, 1]} : vector<8x32xf32> to vector<8x8xf32>
    %244 = vector.extract_strided_slice %241 {offsets = [0, 8], sizes = [8, 8], strides = [1, 1]} : vector<8x32xf32> to vector<8x8xf32>
    %245 = vector.extract_strided_slice %242 {offsets = [0, 16], sizes = [8, 8], strides = [1, 1]} : vector<8x32xf32> to vector<8x8xf32>
    %246 = vector.extract_strided_slice %241 {offsets = [0, 24], sizes = [8, 8], strides = [1, 1]} : vector<8x32xf32> to vector<8x8xf32>
    %247 = arith.mulf %244, %231 : vector<8x8xf32>
    %248 = arith.mulf %243, %245 : vector<8x8xf32>
    %249 = arith.addf %247, %248 : vector<8x8xf32>
    %250 = math.tanh %249 : vector<8x8xf32>
    %251 = arith.mulf %246, %250 : vector<8x8xf32>
    %252 = vector.extract_strided_slice %159 {offsets = [40, 0], sizes = [8, 32], strides = [1, 1]} : vector<64x32xf32> to vector<8x32xf32>
    %cst_44 = arith.constant dense<0.000000e+00> : vector<8x32xf32>
    %253 = tpu.matmul %251, %155, %cst_44 {dimension_numbers = #tpu.dot_dimension_numbers<[1], [0], [0], [1], [0, 0, 1, 1], [], []>} : vector<8x8xf32>, vector<8x32xf32>, vector<8x32xf32> -> vector<8x32xf32>
    %254 = arith.addf %252, %253 : vector<8x32xf32>
    %255 = arith.negf %254 : vector<8x32xf32>
    %256 = math.exp %255 : vector<8x32xf32>
    %cst_45 = arith.constant 1.000000e+00 : f32
    %257 = vector.broadcast %cst_45 : f32 to vector<8x32xf32>
    %258 = arith.addf %257, %256 : vector<8x32xf32>
    %259 = arith.divf %257, %258 : vector<8x32xf32>
    %260 = math.tanh %254 : vector<8x32xf32>
    %261 = vector.extract_strided_slice %259 {offsets = [0, 0], sizes = [8, 8], strides = [1, 1]} : vector<8x32xf32> to vector<8x8xf32>
    %262 = vector.extract_strided_slice %259 {offsets = [0, 8], sizes = [8, 8], strides = [1, 1]} : vector<8x32xf32> to vector<8x8xf32>
    %263 = vector.extract_strided_slice %260 {offsets = [0, 16], sizes = [8, 8], strides = [1, 1]} : vector<8x32xf32> to vector<8x8xf32>
    %264 = vector.extract_strided_slice %259 {offsets = [0, 24], sizes = [8, 8], strides = [1, 1]} : vector<8x32xf32> to vector<8x8xf32>
    %265 = arith.mulf %262, %249 : vector<8x8xf32>
    %266 = arith.mulf %261, %263 : vector<8x8xf32>
    %267 = arith.addf %265, %266 : vector<8x8xf32>
    %268 = math.tanh %267 : vector<8x8xf32>
    %269 = arith.mulf %264, %268 : vector<8x8xf32>
    %270 = vector.extract_strided_slice %159 {offsets = [48, 0], sizes = [8, 32], strides = [1, 1]} : vector<64x32xf32> to vector<8x32xf32>
    %cst_46 = arith.constant dense<0.000000e+00> : vector<8x32xf32>
    %271 = tpu.matmul %269, %155, %cst_46 {dimension_numbers = #tpu.dot_dimension_numbers<[1], [0], [0], [1], [0, 0, 1, 1], [], []>} : vector<8x8xf32>, vector<8x32xf32>, vector<8x32xf32> -> vector<8x32xf32>
    %272 = arith.addf %270, %271 : vector<8x32xf32>
    %273 = arith.negf %272 : vector<8x32xf32>
    %274 = math.exp %273 : vector<8x32xf32>
    %cst_47 = arith.constant 1.000000e+00 : f32
    %275 = vector.broadcast %cst_47 : f32 to vector<8x32xf32>
    %276 = arith.addf %275, %274 : vector<8x32xf32>
    %277 = arith.divf %275, %276 : vector<8x32xf32>
    %278 = math.tanh %272 : vector<8x32xf32>
    %279 = vector.extract_strided_slice %277 {offsets = [0, 0], sizes = [8, 8], strides = [1, 1]} : vector<8x32xf32> to vector<8x8xf32>
    %280 = vector.extract_strided_slice %277 {offsets = [0, 8], sizes = [8, 8], strides = [1, 1]} : vector<8x32xf32> to vector<8x8xf32>
    %281 = vector.extract_strided_slice %278 {offsets = [0, 16], sizes = [8, 8], strides = [1, 1]} : vector<8x32xf32> to vector<8x8xf32>
    %282 = vector.extract_strided_slice %277 {offsets = [0, 24], sizes = [8, 8], strides = [1, 1]} : vector<8x32xf32> to vector<8x8xf32>
    %283 = arith.mulf %280, %267 : vector<8x8xf32>
    %284 = arith.mulf %279, %281 : vector<8x8xf32>
    %285 = arith.addf %283, %284 : vector<8x8xf32>
    %286 = math.tanh %285 : vector<8x8xf32>
    %287 = arith.mulf %282, %286 : vector<8x8xf32>
    %288 = vector.extract_strided_slice %159 {offsets = [56, 0], sizes = [8, 32], strides = [1, 1]} : vector<64x32xf32> to vector<8x32xf32>
    %cst_48 = arith.constant dense<0.000000e+00> : vector<8x32xf32>
    %289 = tpu.matmul %287, %155, %cst_48 {dimension_numbers = #tpu.dot_dimension_numbers<[1], [0], [0], [1], [0, 0, 1, 1], [], []>} : vector<8x8xf32>, vector<8x32xf32>, vector<8x32xf32> -> vector<8x32xf32>
    %290 = arith.addf %288, %289 : vector<8x32xf32>
    %291 = arith.negf %290 : vector<8x32xf32>
    %292 = math.exp %291 : vector<8x32xf32>
    %cst_49 = arith.constant 1.000000e+00 : f32
    %293 = vector.broadcast %cst_49 : f32 to vector<8x32xf32>
    %294 = arith.addf %293, %292 : vector<8x32xf32>
    %295 = arith.divf %293, %294 : vector<8x32xf32>
    %296 = math.tanh %290 : vector<8x32xf32>
    %297 = vector.extract_strided_slice %295 {offsets = [0, 0], sizes = [8, 8], strides = [1, 1]} : vector<8x32xf32> to vector<8x8xf32>
    %298 = vector.extract_strided_slice %295 {offsets = [0, 8], sizes = [8, 8], strides = [1, 1]} : vector<8x32xf32> to vector<8x8xf32>
    %299 = vector.extract_strided_slice %296 {offsets = [0, 16], sizes = [8, 8], strides = [1, 1]} : vector<8x32xf32> to vector<8x8xf32>
    %300 = vector.extract_strided_slice %295 {offsets = [0, 24], sizes = [8, 8], strides = [1, 1]} : vector<8x32xf32> to vector<8x8xf32>
    %301 = arith.mulf %298, %285 : vector<8x8xf32>
    %302 = arith.mulf %297, %299 : vector<8x8xf32>
    %303 = arith.addf %301, %302 : vector<8x8xf32>
    %304 = math.tanh %303 : vector<8x8xf32>
    %305 = arith.mulf %300, %304 : vector<8x8xf32>
    %306 = tpu.concatenate %179, %197, %215, %233, %251, %269, %287, %305 in 1 : vector<8x8xf32>, vector<8x8xf32>, vector<8x8xf32>, vector<8x8xf32>, vector<8x8xf32>, vector<8x8xf32>, vector<8x8xf32>, vector<8x8xf32> -> vector<8x64xf32>
    %c0_50 = arith.constant 0 : index
    %c0_51 = arith.constant 0 : index
    %307 = vector.load %arg7[%c0_50, %c0_51] : memref<64x32xf32, #tpu.memory_space<vmem>>, vector<64x32xf32>
    %cst_52 = arith.constant dense<0.000000e+00> : vector<8x32xf32>
    %308 = tpu.matmul %306, %307, %cst_52 {dimension_numbers = #tpu.dot_dimension_numbers<[1], [0], [0], [1], [0, 0, 1, 1], [], []>} : vector<8x64xf32>, vector<64x32xf32>, vector<8x32xf32> -> vector<8x32xf32>
    %c0_53 = arith.constant 0 : index
    %c0_54 = arith.constant 0 : index
    %309 = vector.load %arg8[%c0_53, %c0_54] : memref<1x32xf32, #tpu.memory_space<vmem>>, vector<1x32xf32>
    %310 = vector.broadcast %309 : vector<1x32xf32> to vector<8x32xf32>
    %311 = arith.addf %308, %310 : vector<8x32xf32>
    %c0_55 = arith.constant 0 : index
    %c0_56 = arith.constant 0 : index
    %312 = vector.load %arg9[%c0_55, %c0_56] : memref<8x32xf32, #tpu.memory_space<vmem>>, vector<8x32xf32>
    tpu.vector_store %arg9[%c0_55, %c0_56], %311 {strides = array<i32>} : memref<8x32xf32, #tpu.memory_space<vmem>>, vector<8x32xf32>,
    return
  }
}

</mosaic_0001>

<llo_original>
// kernel: lstm_forward.1
$region0: #{lstm_forward.1}
  #allocation0 [shape = 'u32[]', space=smem, size = 0x4, offset = 0x4, fixed_abs, tag = 'smem constant byte address 0x4 - core index']
  #allocation1 [shape = 'u32[72,128]{1,0:T(1,128)}', space=vmem, size = 0x9000, scoped, tag = 'internal scratch']
  %s0 = inlined_call_operand.vmem [shape: f32[64,16], index: 0, kind: input, shape index: {}]
  %s1 = inlined_call_operand.vmem [shape: f32[16,128], index: 1, kind: input, shape index: {}]
  %s2 = inlined_call_operand.vmem [shape: f32[32,128], index: 2, kind: input, shape index: {}]
  %s3 = inlined_call_operand.vmem [shape: f32[1,128], index: 3, kind: input, shape index: {}]
  %s4 = inlined_call_operand.vmem [shape: f32[32,32], index: 4, kind: input, shape index: {}]
  %s5 = inlined_call_operand.vmem [shape: f32[8,32], index: 5, kind: input, shape index: {}]
  %s6 = inlined_call_operand.vmem [shape: f32[1,32], index: 6, kind: input, shape index: {}]
  %s7 = inlined_call_operand.vmem [shape: f32[64,32], index: 7, kind: input, shape index: {}]
  %s8 = inlined_call_operand.vmem [shape: f32[1,32], index: 8, kind: input, shape index: {}]
  %s9 = inlined_call_operand.vmem [shape: f32[8,32], index: 9, kind: output, shape index: {}]
  %s10 = sld [smem:[#allocation0]]
  $region46: #{lstm_forward.1} parent=0
    _
  %s12 = ssub.s32 1, %s10
  %s13 = scalar_select 0, %s12, %s10
  // Predicated region
  $region2: #{lstm_forward.1} parent=0 // pred_check
    _
  $region3: #{lstm_forward.1} parent=0 // pred_check_branch
    %15 = sbr.rel (0) target = $region5
  $region4: #{lstm_forward.1} parent=0 // pred_region
    _
  $region5: #{lstm_forward.1} parent=0 // pred_fallthru
    _
  // Predicated region
  $region6: #{lstm_forward.1} parent=0 // pred_check
    _
  $region7: #{lstm_forward.1} parent=0 // pred_check_branch
    %17 = sbr.rel (0) target = $region9
  $region8: #{lstm_forward.1} parent=0 // pred_region
    _
  $region9: #{lstm_forward.1} parent=0 // pred_fallthru
    _
  // Predicated region
  $region10: #{lstm_forward.1} parent=0 // pred_check
    _
  $region11: #{lstm_forward.1} parent=0 // pred_check_branch
    %19 = sbr.rel (0) target = $region13
  $region12: #{lstm_forward.1} parent=0 // pred_region
    _
  $region13: #{lstm_forward.1} parent=0 // pred_fallthru
    _
  // Predicated region
  $region14: #{lstm_forward.1} parent=0 // pred_check
    _
  $region15: #{lstm_forward.1} parent=0 // pred_check_branch
    %21 = sbr.rel (0) target = $region17
  $region16: #{lstm_forward.1} parent=0 // pred_region
    _
  $region17: #{lstm_forward.1} parent=0 // pred_fallthru
    _
  // Predicated region
  $region18: #{lstm_forward.1} parent=0 // pred_check
    _
  $region19: #{lstm_forward.1} parent=0 // pred_check_branch
    %23 = sbr.rel (0) target = $region21
  $region20: #{lstm_forward.1} parent=0 // pred_region
    _
  $region21: #{lstm_forward.1} parent=0 // pred_fallthru
    _
  // Predicated region
  $region22: #{lstm_forward.1} parent=0 // pred_check
    _
  $region23: #{lstm_forward.1} parent=0 // pred_check_branch
    %25 = sbr.rel (0) target = $region25
  $region24: #{lstm_forward.1} parent=0 // pred_region
    _
  $region25: #{lstm_forward.1} parent=0 // pred_fallthru
    _
  // Predicated region
  $region26: #{lstm_forward.1} parent=0 // pred_check
    _
  $region27: #{lstm_forward.1} parent=0 // pred_check_branch
    %27 = sbr.rel (0) target = $region29
  $region28: #{lstm_forward.1} parent=0 // pred_region
    _
  $region29: #{lstm_forward.1} parent=0 // pred_fallthru
    _
  // Predicated region
  $region30: #{lstm_forward.1} parent=0 // pred_check
    _
  $region31: #{lstm_forward.1} parent=0 // pred_check_branch
    %29 = sbr.rel (0) target = $region33
  $region32: #{lstm_forward.1} parent=0 // pred_region
    _
  $region33: #{lstm_forward.1} parent=0 // pred_fallthru
    _
  // Predicated region
  $region34: #{lstm_forward.1} parent=0 // pred_check
    _
  $region35: #{lstm_forward.1} parent=0 // pred_check_branch
    %31 = sbr.rel (0) target = $region37
  $region36: #{lstm_forward.1} parent=0 // pred_region
    _
  $region37: #{lstm_forward.1} parent=0 // pred_fallthru
    _
  %v32 = vld [vmem:[%s0] sm:$0xff]
  %v33 = vld [vmem:[%s0 + $0x8] sm:$0xff]
  %v34 = vld [vmem:[%s0 + $0x10] sm:$0xff]
  %v35 = vld [vmem:[%s0 + $0x18] sm:$0xff]
  %v36 = vld [vmem:[%s0 + $0x20] sm:$0xff]
  %v37 = vld [vmem:[%s0 + $0x28] sm:$0xff]
  %v38 = vld [vmem:[%s0 + $0x30] sm:$0xff]
  %v39 = vld [vmem:[%s0 + $0x38] sm:$0xff]
  %v40 = vld [vmem:[%s1] sm:$0xff]
  %v41 = vld [vmem:[%s1 + $0x8] sm:$0xff]
  %v42 = vld [vmem:[%s2] sm:$0xff]
  %v43 = vld [vmem:[%s2 + $0x8] sm:$0xff]
  %v44 = vld [vmem:[%s2 + $0x10] sm:$0xff]
  %v45 = vld [vmem:[%s2 + $0x18] sm:$0xff]
  %v46 = vld [vmem:[%s3] sm:$0x1]
  %v48 = vperm.slane %v46, 0
  %vm50 = vcmask 130048
  %v52 = vsel %vm50, %v32, 0
  %v55 = vsel %vm50, %v33, 0
  %v58 = vsel %vm50, %v34, 0
  %v61 = vsel %vm50, %v35, 0
  %v64 = vsel %vm50, %v36, 0
  %v67 = vsel %vm50, %v37, 0
  %v70 = vsel %vm50, %v38, 0
  %v73 = vsel %vm50, %v39, 0
  %75 = vmatpush.msra.mxu0 0.0
  %76 = vmatpush.msra.mxu0 0.0
  %77 = vmatpush.msra.mxu0 0.0
  %78 = vmatpush.msra.mxu0 0.0
  %79 = vmatpush.msra.mxu0 0.0
  %80 = vmatpush.msra.mxu0 0.0
  %81 = vmatpush.msra.mxu0 0.0
  %82 = vmatpush.msra.mxu0 0.0
  %83 = vmatpush.msra.mxu0 0.0
  %84 = vmatpush.msra.mxu0 0.0
  %85 = vmatpush.msra.mxu0 0.0
  %86 = vmatpush.msra.mxu0 0.0
  %87 = vmatpush.msra.mxu0 0.0
  %88 = vmatpush.msra.mxu0 0.0
  %89 = vmatpush.msra.mxu0 %v41
  %90 = vmatpush.msra.mxu0 %v40
  %91 = vmatmul.f32.gmra.mxu0 %v52
  %v92 = vpop.f32.mrf.mxu0
  %v93 = vadd.f32 %v48, %v92
  %94 = vmatmul.f32.gmra.mxu0 %v55
  %v95 = vpop.f32.mrf.mxu0
  %v96 = vadd.f32 %v48, %v95
  %97 = vmatmul.f32.gmra.mxu0 %v58
  %v98 = vpop.f32.mrf.mxu0
  %v99 = vadd.f32 %v48, %v98
  %100 = vmatmul.f32.gmra.mxu0 %v61
  %v101 = vpop.f32.mrf.mxu0
  %v102 = vadd.f32 %v48, %v101
  %103 = vmatmul.f32.gmra.mxu0 %v64
  %v104 = vpop.f32.mrf.mxu0
  %v105 = vadd.f32 %v48, %v104
  %106 = vmatmul.f32.gmra.mxu0 %v67
  %v107 = vpop.f32.mrf.mxu0
  %v108 = vadd.f32 %v48, %v107
  %109 = vmatmul.f32.gmra.mxu0 %v70
  %v110 = vpop.f32.mrf.mxu0
  %v111 = vadd.f32 %v48, %v110
  %112 = vmatmul.f32.gmra.mxu0 %v73
  %v113 = vpop.f32.mrf.mxu0
  %v114 = vadd.f32 %v48, %v113
  %115 = vdwg.mxu0
  %vm116 = vcmask 261120
  %v118 = vsel %vm116, 0.0, 0
  %120 = vmatpush.msra.mxu0 0.0
  %121 = vmatpush.msra.mxu0 0.0
  %122 = vmatpush.msra.mxu0 0.0
  %123 = vmatpush.msra.mxu0 0.0
  %124 = vmatpush.msra.mxu0 0.0
  %125 = vmatpush.msra.mxu0 0.0
  %126 = vmatpush.msra.mxu0 0.0
  %127 = vmatpush.msra.mxu0 0.0
  %128 = vmatpush.msra.mxu0 0.0
  %129 = vmatpush.msra.mxu0 0.0
  %130 = vmatpush.msra.mxu0 0.0
  %131 = vmatpush.msra.mxu0 0.0
  %132 = vmatpush.msra.mxu0 %v45
  %133 = vmatpush.msra.mxu0 %v44
  %134 = vmatpush.msra.mxu0 %v43
  %135 = vmatpush.msra.mxu0 %v42
  %136 = vmatmul.f32.gmra.mxu0 %v118
  %v137 = vpop.f32.mrf.mxu0
  %v138 = vadd.f32 0.0, %v137
  %139 = vdwg.mxu0
  %v140 = vadd.f32 %v93, %v138
  %v141 = vxor.u32 %v140, 2147483648
  %v142 = vmul.f32 %v141, 1.442695
  %v143 = vpow.pop %v142
  %v144 = vadd.f32 %v143, 1.0
  %v145 = vrcp.pop %v144
  %v146 = vmul.f32 %v144, %v145
  %v147 = vsub.f32 1.0, %v146
  %v148 = vmul.f32 %v145, %v147
  %v149 = vadd.f32 %v145, %v148
  %vm150 = vweird.f32 %v144
  %vm151 = vweird.f32 %v145
  %vm152 = vmor %vm150, %vm151
  %v153 = vsel %vm152, %v145, %v149
  %v154 = vand.u32 2147483647, %v144
  %vm155 = vcmp.eq.f32.partialorder %v154, 8.507059e+37
  %v156 = vand.u32 %v144, 2147483648
  %v157 = vor.u32 1.1754944e-38, %v156
  %v158 = vsel %vm155, %v157, %v153
  %v159 = vmul.f32 1.0, %v158
  %v160 = vtanh.pop %v140
  %v161 = vmul.f32 %v159, 0.0
  %163 = vrot.lane.b32.xlu0 %v160, 64
  %v164 = vpop.permute.xlu0 %163
  %v166 = vmul.f32 %v159, %v164
  %168 = vrot.lane.b32.xlu0 %v166, 32
  %v169 = vpop.permute.xlu0 %168
  %v171 = vadd.f32 %v161, %v169
  %v172 = vtanh.pop %v171
  %174 = vrot.lane.b32.xlu0 %v172, 64
  %v175 = vpop.permute.xlu0 %174
  %v177 = vmul.f32 %v159, %v175
  %179 = vrot.lane.b32.xlu0 %v177, 32
  %v180 = vpop.permute.xlu0 %179
  %v181 = vsel %vm116, %v180, 0
  %183 = vmatpush.msra.mxu0 0.0
  %184 = vmatpush.msra.mxu0 0.0
  %185 = vmatpush.msra.mxu0 0.0
  %186 = vmatpush.msra.mxu0 0.0
  %187 = vmatpush.msra.mxu0 0.0
  %188 = vmatpush.msra.mxu0 0.0
  %189 = vmatpush.msra.mxu0 0.0
  %190 = vmatpush.msra.mxu0 0.0
  %191 = vmatpush.msra.mxu0 0.0
  %192 = vmatpush.msra.mxu0 0.0
  %193 = vmatpush.msra.mxu0 0.0
  %194 = vmatpush.msra.mxu0 0.0
  %195 = vmatpush.msra.mxu0 %v45
  %196 = vmatpush.msra.mxu0 %v44
  %197 = vmatpush.msra.mxu0 %v43
  %198 = vmatpush.msra.mxu0 %v42
  %199 = vmatmul.f32.gmra.mxu0 %v181
  %v200 = vpop.f32.mrf.mxu0
  %v201 = vadd.f32 0.0, %v200
  %202 = vdwg.mxu0
  %v203 = vadd.f32 %v96, %v201
  %v204 = vxor.u32 %v203, 2147483648
  %v205 = vmul.f32 %v204, 1.442695
  %v206 = vpow.pop %v205
  %v207 = vadd.f32 %v206, 1.0
  %v208 = vrcp.pop %v207
  %v209 = vmul.f32 %v207, %v208
  %v210 = vsub.f32 1.0, %v209
  %v211 = vmul.f32 %v208, %v210
  %v212 = vadd.f32 %v208, %v211
  %vm213 = vweird.f32 %v207
  %vm214 = vweird.f32 %v208
  %vm215 = vmor %vm213, %vm214
  %v216 = vsel %vm215, %v208, %v212
  %v217 = vand.u32 2147483647, %v207
  %vm218 = vcmp.eq.f32.partialorder %v217, 8.507059e+37
  %v219 = vand.u32 %v207, 2147483648
  %v220 = vor.u32 1.1754944e-38, %v219
  %v221 = vsel %vm218, %v220, %v216
  %v222 = vmul.f32 1.0, %v221
  %v223 = vtanh.pop %v203
  %v224 = vmul.f32 %v222, %v171
  %226 = vrot.lane.b32.xlu0 %v223, 64
  %v227 = vpop.permute.xlu0 %226
  %v229 = vmul.f32 %v222, %v227
  %231 = vrot.lane.b32.xlu0 %v229, 32
  %v232 = vpop.permute.xlu0 %231
  %v234 = vadd.f32 %v224, %v232
  %v235 = vtanh.pop %v234
  %237 = vrot.lane.b32.xlu0 %v235, 64
  %v238 = vpop.permute.xlu0 %237
  %v240 = vmul.f32 %v222, %v238
  %242 = vrot.lane.b32.xlu0 %v240, 32
  %v243 = vpop.permute.xlu0 %242
  %v244 = vsel %vm116, %v243, 0
  %246 = vmatpush.msra.mxu0 0.0
  %247 = vmatpush.msra.mxu0 0.0
  %248 = vmatpush.msra.mxu0 0.0
  %249 = vmatpush.msra.mxu0 0.0
  %250 = vmatpush.msra.mxu0 0.0
  %251 = vmatpush.msra.mxu0 0.0
  %252 = vmatpush.msra.mxu0 0.0
  %253 = vmatpush.msra.mxu0 0.0
  %254 = vmatpush.msra.mxu0 0.0
  %255 = vmatpush.msra.mxu0 0.0
  %256 = vmatpush.msra.mxu0 0.0
  %257 = vmatpush.msra.mxu0 0.0
  %258 = vmatpush.msra.mxu0 %v45
  %259 = vmatpush.msra.mxu0 %v44
  %260 = vmatpush.msra.mxu0 %v43
  %261 = vmatpush.msra.mxu0 %v42
  %262 = vmatmul.f32.gmra.mxu0 %v244
  %v263 = vpop.f32.mrf.mxu0
  %v264 = vadd.f32 0.0, %v263
  %265 = vdwg.mxu0
  %v266 = vadd.f32 %v99, %v264
  %v267 = vxor.u32 %v266, 2147483648
  %v268 = vmul.f32 %v267, 1.442695
  %v269 = vpow.pop %v268
  %v270 = vadd.f32 %v269, 1.0
  %v271 = vrcp.pop %v270
  %v272 = vmul.f32 %v270, %v271
  %v273 = vsub.f32 1.0, %v272
  %v274 = vmul.f32 %v271, %v273
  %v275 = vadd.f32 %v271, %v274
  %vm276 = vweird.f32 %v270
  %vm277 = vweird.f32 %v271
  %vm278 = vmor %vm276, %vm277
  %v279 = vsel %vm278, %v271, %v275
  %v280 = vand.u32 2147483647, %v270
  %vm281 = vcmp.eq.f32.partialorder %v280, 8.507059e+37
  %v282 = vand.u32 %v270, 2147483648
  %v283 = vor.u32 1.1754944e-38, %v282
  %v284 = vsel %vm281, %v283, %v279
  %v285 = vmul.f32 1.0, %v284
  %v286 = vtanh.pop %v266
  %v287 = vmul.f32 %v285, %v234
  %289 = vrot.lane.b32.xlu0 %v286, 64
  %v290 = vpop.permute.xlu0 %289
  %v292 = vmul.f32 %v285, %v290
  %294 = vrot.lane.b32.xlu0 %v292, 32
  %v295 = vpop.permute.xlu0 %294
  %v297 = vadd.f32 %v287, %v295
  %v298 = vtanh.pop %v297
  %300 = vrot.lane.b32.xlu0 %v298, 64
  %v301 = vpop.permute.xlu0 %300
  %v303 = vmul.f32 %v285, %v301
  %305 = vrot.lane.b32.xlu0 %v303, 32
  %v306 = vpop.permute.xlu0 %305
  %v307 = vsel %vm116, %v306, 0
  %309 = vmatpush.msra.mxu0 0.0
  %310 = vmatpush.msra.mxu0 0.0
  %311 = vmatpush.msra.mxu0 0.0
  %312 = vmatpush.msra.mxu0 0.0
  %313 = vmatpush.msra.mxu0 0.0
  %314 = vmatpush.msra.mxu0 0.0
  %315 = vmatpush.msra.mxu0 0.0
  %316 = vmatpush.msra.mxu0 0.0
  %317 = vmatpush.msra.mxu0 0.0
  %318 = vmatpush.msra.mxu0 0.0
  %319 = vmatpush.msra.mxu0 0.0
  %320 = vmatpush.msra.mxu0 0.0
  %321 = vmatpush.msra.mxu0 %v45
  %322 = vmatpush.msra.mxu0 %v44
  %323 = vmatpush.msra.mxu0 %v43
  %324 = vmatpush.msra.mxu0 %v42
  %325 = vmatmul.f32.gmra.mxu0 %v307
  %v326 = vpop.f32.mrf.mxu0
  %v327 = vadd.f32 0.0, %v326
  %328 = vdwg.mxu0
  %v329 = vadd.f32 %v102, %v327
  %v330 = vxor.u32 %v329, 2147483648
  %v331 = vmul.f32 %v330, 1.442695
  %v332 = vpow.pop %v331
  %v333 = vadd.f32 %v332, 1.0
  %v334 = vrcp.pop %v333
  %v335 = vmul.f32 %v333, %v334
  %v336 = vsub.f32 1.0, %v335
  %v337 = vmul.f32 %v334, %v336
  %v338 = vadd.f32 %v334, %v337
  %vm339 = vweird.f32 %v333
  %vm340 = vweird.f32 %v334
  %vm341 = vmor %vm339, %vm340
  %v342 = vsel %vm341, %v334, %v338
  %v343 = vand.u32 2147483647, %v333
  %vm344 = vcmp.eq.f32.partialorder %v343, 8.507059e+37
  %v345 = vand.u32 %v333, 2147483648
  %v346 = vor.u32 1.1754944e-38, %v345
  %v347 = vsel %vm344, %v346, %v342
  %v348 = vmul.f32 1.0, %v347
  %v349 = vtanh.pop %v329
  %v350 = vmul.f32 %v348, %v297
  %352 = vrot.lane.b32.xlu0 %v349, 64
  %v353 = vpop.permute.xlu0 %352
  %v355 = vmul.f32 %v348, %v353
  %357 = vrot.lane.b32.xlu0 %v355, 32
  %v358 = vpop.permute.xlu0 %357
  %v360 = vadd.f32 %v350, %v358
  %v361 = vtanh.pop %v360
  %363 = vrot.lane.b32.xlu0 %v361, 64
  %v364 = vpop.permute.xlu0 %363
  %v366 = vmul.f32 %v348, %v364
  %368 = vrot.lane.b32.xlu0 %v366, 32
  %v369 = vpop.permute.xlu0 %368
  %v370 = vsel %vm116, %v369, 0
  %372 = vmatpush.msra.mxu0 0.0
  %373 = vmatpush.msra.mxu0 0.0
  %374 = vmatpush.msra.mxu0 0.0
  %375 = vmatpush.msra.mxu0 0.0
  %376 = vmatpush.msra.mxu0 0.0
  %377 = vmatpush.msra.mxu0 0.0
  %378 = vmatpush.msra.mxu0 0.0
  %379 = vmatpush.msra.mxu0 0.0
  %380 = vmatpush.msra.mxu0 0.0
  %381 = vmatpush.msra.mxu0 0.0
  %382 = vmatpush.msra.mxu0 0.0
  %383 = vmatpush.msra.mxu0 0.0
  %384 = vmatpush.msra.mxu0 %v45
  %385 = vmatpush.msra.mxu0 %v44
  %386 = vmatpush.msra.mxu0 %v43
  %387 = vmatpush.msra.mxu0 %v42
  %388 = vmatmul.f32.gmra.mxu0 %v370
  %v389 = vpop.f32.mrf.mxu0
  %v390 = vadd.f32 0.0, %v389
  %391 = vdwg.mxu0
  %v392 = vadd.f32 %v105, %v390
  %v393 = vxor.u32 %v392, 2147483648
  %v394 = vmul.f32 %v393, 1.442695
  %v395 = vpow.pop %v394
  %v396 = vadd.f32 %v395, 1.0
  %v397 = vrcp.pop %v396
  %v398 = vmul.f32 %v396, %v397
  %v399 = vsub.f32 1.0, %v398
  %v400 = vmul.f32 %v397, %v399
  %v401 = vadd.f32 %v397, %v400
  %vm402 = vweird.f32 %v396
  %vm403 = vweird.f32 %v397
  %vm404 = vmor %vm402, %vm403
  %v405 = vsel %vm404, %v397, %v401
  %v406 = vand.u32 2147483647, %v396
  %vm407 = vcmp.eq.f32.partialorder %v406, 8.507059e+37
  %v408 = vand.u32 %v396, 2147483648
  %v409 = vor.u32 1.1754944e-38, %v408
  %v410 = vsel %vm407, %v409, %v405
  %v411 = vmul.f32 1.0, %v410
  %v412 = vtanh.pop %v392
  %v413 = vmul.f32 %v411, %v360
  %415 = vrot.lane.b32.xlu0 %v412, 64
  %v416 = vpop.permute.xlu0 %415
  %v418 = vmul.f32 %v411, %v416
  %420 = vrot.lane.b32.xlu0 %v418, 32
  %v421 = vpop.permute.xlu0 %420
  %v423 = vadd.f32 %v413, %v421
  %v424 = vtanh.pop %v423
  %426 = vrot.lane.b32.xlu0 %v424, 64
  %v427 = vpop.permute.xlu0 %426
  %v429 = vmul.f32 %v411, %v427
  %431 = vrot.lane.b32.xlu0 %v429, 32
  %v432 = vpop.permute.xlu0 %431
  %v433 = vsel %vm116, %v432, 0
  %435 = vmatpush.msra.mxu0 0.0
  %436 = vmatpush.msra.mxu0 0.0
  %437 = vmatpush.msra.mxu0 0.0
  %438 = vmatpush.msra.mxu0 0.0
  %439 = vmatpush.msra.mxu0 0.0
  %440 = vmatpush.msra.mxu0 0.0
  %441 = vmatpush.msra.mxu0 0.0
  %442 = vmatpush.msra.mxu0 0.0
  %443 = vmatpush.msra.mxu0 0.0
  %444 = vmatpush.msra.mxu0 0.0
  %445 = vmatpush.msra.mxu0 0.0
  %446 = vmatpush.msra.mxu0 0.0
  %447 = vmatpush.msra.mxu0 %v45
  %448 = vmatpush.msra.mxu0 %v44
  %449 = vmatpush.msra.mxu0 %v43
  %450 = vmatpush.msra.mxu0 %v42
  %451 = vmatmul.f32.gmra.mxu0 %v433
  %v452 = vpop.f32.mrf.mxu0
  %v453 = vadd.f32 0.0, %v452
  %454 = vdwg.mxu0
  %v455 = vadd.f32 %v108, %v453
  %v456 = vxor.u32 %v455, 2147483648
  %v457 = vmul.f32 %v456, 1.442695
  %v458 = vpow.pop %v457
  %v459 = vadd.f32 %v458, 1.0
  %v460 = vrcp.pop %v459
  %v461 = vmul.f32 %v459, %v460
  %v462 = vsub.f32 1.0, %v461
  %v463 = vmul.f32 %v460, %v462
  %v464 = vadd.f32 %v460, %v463
  %vm465 = vweird.f32 %v459
  %vm466 = vweird.f32 %v460
  %vm467 = vmor %vm465, %vm466
  %v468 = vsel %vm467, %v460, %v464
  %v469 = vand.u32 2147483647, %v459
  %vm470 = vcmp.eq.f32.partialorder %v469, 8.507059e+37
  %v471 = vand.u32 %v459, 2147483648
  %v472 = vor.u32 1.1754944e-38, %v471
  %v473 = vsel %vm470, %v472, %v468
  %v474 = vmul.f32 1.0, %v473
  %v475 = vtanh.pop %v455
  %v476 = vmul.f32 %v474, %v423
  %478 = vrot.lane.b32.xlu0 %v475, 64
  %v479 = vpop.permute.xlu0 %478
  %v481 = vmul.f32 %v474, %v479
  %483 = vrot.lane.b32.xlu0 %v481, 32
  %v484 = vpop.permute.xlu0 %483
  %v486 = vadd.f32 %v476, %v484
  %v487 = vtanh.pop %v486
  %489 = vrot.lane.b32.xlu0 %v487, 64
  %v490 = vpop.permute.xlu0 %489
  %v492 = vmul.f32 %v474, %v490
  %494 = vrot.lane.b32.xlu0 %v492, 32
  %v495 = vpop.permute.xlu0 %494
  %v496 = vsel %vm116, %v495, 0
  %498 = vmatpush.msra.mxu0 0.0
  %499 = vmatpush.msra.mxu0 0.0
  %500 = vmatpush.msra.mxu0 0.0
  %501 = vmatpush.msra.mxu0 0.0
  %502 = vmatpush.msra.mxu0 0.0
  %503 = vmatpush.msra.mxu0 0.0
  %504 = vmatpush.msra.mxu0 0.0
  %505 = vmatpush.msra.mxu0 0.0
  %506 = vmatpush.msra.mxu0 0.0
  %507 = vmatpush.msra.mxu0 0.0
  %508 = vmatpush.msra.mxu0 0.0
  %509 = vmatpush.msra.mxu0 0.0
  %510 = vmatpush.msra.mxu0 %v45
  %511 = vmatpush.msra.mxu0 %v44
  %512 = vmatpush.msra.mxu0 %v43
  %513 = vmatpush.msra.mxu0 %v42
  %514 = vmatmul.f32.gmra.mxu0 %v496
  %v515 = vpop.f32.mrf.mxu0
  %v516 = vadd.f32 0.0, %v515
  %517 = vdwg.mxu0
  %v518 = vadd.f32 %v111, %v516
  %v519 = vxor.u32 %v518, 2147483648
  %v520 = vmul.f32 %v519, 1.442695
  %v521 = vpow.pop %v520
  %v522 = vadd.f32 %v521, 1.0
  %v523 = vrcp.pop %v522
  %v524 = vmul.f32 %v522, %v523
  %v525 = vsub.f32 1.0, %v524
  %v526 = vmul.f32 %v523, %v525
  %v527 = vadd.f32 %v523, %v526
  %vm528 = vweird.f32 %v522
  %vm529 = vweird.f32 %v523
  %vm530 = vmor %vm528, %vm529
  %v531 = vsel %vm530, %v523, %v527
  %v532 = vand.u32 2147483647, %v522
  %vm533 = vcmp.eq.f32.partialorder %v532, 8.507059e+37
  %v534 = vand.u32 %v522, 2147483648
  %v535 = vor.u32 1.1754944e-38, %v534
  %v536 = vsel %vm533, %v535, %v531
  %v537 = vmul.f32 1.0, %v536
  %v538 = vtanh.pop %v518
  %v539 = vmul.f32 %v537, %v486
  %541 = vrot.lane.b32.xlu0 %v538, 64
  %v542 = vpop.permute.xlu0 %541
  %v544 = vmul.f32 %v537, %v542
  %546 = vrot.lane.b32.xlu0 %v544, 32
  %v547 = vpop.permute.xlu0 %546
  %v549 = vadd.f32 %v539, %v547
  %v550 = vtanh.pop %v549
  %552 = vrot.lane.b32.xlu0 %v550, 64
  %v553 = vpop.permute.xlu0 %552
  %v555 = vmul.f32 %v537, %v553
  %557 = vrot.lane.b32.xlu0 %v555, 32
  %v558 = vpop.permute.xlu0 %557
  %v559 = vsel %vm116, %v558, 0
  %561 = vmatpush.msra.mxu0 0.0
  %562 = vmatpush.msra.mxu0 0.0
  %563 = vmatpush.msra.mxu0 0.0
  %564 = vmatpush.msra.mxu0 0.0
  %565 = vmatpush.msra.mxu0 0.0
  %566 = vmatpush.msra.mxu0 0.0
  %567 = vmatpush.msra.mxu0 0.0
  %568 = vmatpush.msra.mxu0 0.0
  %569 = vmatpush.msra.mxu0 0.0
  %570 = vmatpush.msra.mxu0 0.0
  %571 = vmatpush.msra.mxu0 0.0
  %572 = vmatpush.msra.mxu0 0.0
  %573 = vmatpush.msra.mxu0 %v45
  %574 = vmatpush.msra.mxu0 %v44
  %575 = vmatpush.msra.mxu0 %v43
  %576 = vmatpush.msra.mxu0 %v42
  %577 = vmatmul.f32.gmra.mxu0 %v559
  %v578 = vpop.f32.mrf.mxu0
  %v579 = vadd.f32 0.0, %v578
  %580 = vdwg.mxu0
  %v581 = vadd.f32 %v114, %v579
  %v582 = vxor.u32 %v581, 2147483648
  %v583 = vmul.f32 %v582, 1.442695
  %v584 = vpow.pop %v583
  %v585 = vadd.f32 %v584, 1.0
  %v586 = vrcp.pop %v585
  %v587 = vmul.f32 %v585, %v586
  %v588 = vsub.f32 1.0, %v587
  %v589 = vmul.f32 %v586, %v588
  %v590 = vadd.f32 %v586, %v589
  %vm591 = vweird.f32 %v585
  %vm592 = vweird.f32 %v586
  %vm593 = vmor %vm591, %vm592
  %v594 = vsel %vm593, %v586, %v590
  %v595 = vand.u32 2147483647, %v585
  %vm596 = vcmp.eq.f32.partialorder %v595, 8.507059e+37
  %v597 = vand.u32 %v585, 2147483648
  %v598 = vor.u32 1.1754944e-38, %v597
  %v599 = vsel %vm596, %v598, %v594
  %v600 = vmul.f32 1.0, %v599
  %v601 = vtanh.pop %v581
  %v602 = vmul.f32 %v600, %v549
  %604 = vrot.lane.b32.xlu0 %v601, 64
  %v605 = vpop.permute.xlu0 %604
  %v607 = vmul.f32 %v600, %v605
  %609 = vrot.lane.b32.xlu0 %v607, 32
  %v610 = vpop.permute.xlu0 %609
  %v612 = vadd.f32 %v602, %v610
  %v613 = vtanh.pop %v612
  %615 = vrot.lane.b32.xlu0 %v613, 64
  %v616 = vpop.permute.xlu0 %615
  %v618 = vmul.f32 %v600, %v616
  %v619 = vld [vmem:[%s4] sm:$0xff]
  %v620 = vld [vmem:[%s4 + $0x8] sm:$0xff]
  %v621 = vld [vmem:[%s4 + $0x10] sm:$0xff]
  %v622 = vld [vmem:[%s4 + $0x18] sm:$0xff]
  %v623 = vld [vmem:[%s5] sm:$0xff]
  %v624 = vld [vmem:[%s6] sm:$0x1]
  %v626 = vperm.slane %v624, 0
  %629 = vrot.lane.b32.xlu0 %v618, 32
  %v630 = vpop.permute.xlu0 %629
  %v631 = vsel %vm116, %v630, 0
  %633 = vmatpush.msra.mxu0 0.0
  %634 = vmatpush.msra.mxu0 0.0
  %635 = vmatpush.msra.mxu0 0.0
  %636 = vmatpush.msra.mxu0 0.0
  %637 = vmatpush.msra.mxu0 0.0
  %638 = vmatpush.msra.mxu0 0.0
  %639 = vmatpush.msra.mxu0 0.0
  %640 = vmatpush.msra.mxu0 0.0
  %641 = vmatpush.msra.mxu0 0.0
  %642 = vmatpush.msra.mxu0 0.0
  %643 = vmatpush.msra.mxu0 0.0
  %644 = vmatpush.msra.mxu0 0.0
  %645 = vmatpush.msra.mxu0 %v622
  %646 = vmatpush.msra.mxu0 %v621
  %647 = vmatpush.msra.mxu0 %v620
  %648 = vmatpush.msra.mxu0 %v619
  %649 = vmatmul.f32.gmra.mxu0 %v181
  %v650 = vpop.f32.mrf.mxu0
  %v651 = vadd.f32 %v626, %v650
  %652 = vmatmul.f32.gmra.mxu0 %v244
  %v653 = vpop.f32.mrf.mxu0
  %v654 = vadd.f32 %v626, %v653
  %655 = vmatmul.f32.gmra.mxu0 %v307
  %v656 = vpop.f32.mrf.mxu0
  %v657 = vadd.f32 %v626, %v656
  %658 = vmatmul.f32.gmra.mxu0 %v370
  %v659 = vpop.f32.mrf.mxu0
  %v660 = vadd.f32 %v626, %v659
  %661 = vmatmul.f32.gmra.mxu0 %v433
  %v662 = vpop.f32.mrf.mxu0
  %v663 = vadd.f32 %v626, %v662
  %664 = vmatmul.f32.gmra.mxu0 %v496
  %v665 = vpop.f32.mrf.mxu0
  %v666 = vadd.f32 %v626, %v665
  %667 = vmatmul.f32.gmra.mxu0 %v559
  %v668 = vpop.f32.mrf.mxu0
  %v669 = vadd.f32 %v626, %v668
  %670 = vmatmul.f32.gmra.mxu0 %v631
  %v671 = vpop.f32.mrf.mxu0
  %v672 = vadd.f32 %v626, %v671
  %673 = vdwg.mxu0
  %vm674 = vcmask 64512
  %v675 = vsel %vm674, 0.0, 0
  %677 = vmatpush.msra.mxu0 0.0
  %678 = vmatpush.msra.mxu0 0.0
  %679 = vmatpush.msra.mxu0 0.0
  %680 = vmatpush.msra.mxu0 0.0
  %681 = vmatpush.msra.mxu0 0.0
  %682 = vmatpush.msra.mxu0 0.0
  %683 = vmatpush.msra.mxu0 0.0
  %684 = vmatpush.msra.mxu0 0.0
  %685 = vmatpush.msra.mxu0 0.0
  %686 = vmatpush.msra.mxu0 0.0
  %687 = vmatpush.msra.mxu0 0.0
  %688 = vmatpush.msra.mxu0 0.0
  %689 = vmatpush.msra.mxu0 0.0
  %690 = vmatpush.msra.mxu0 0.0
  %691 = vmatpush.msra.mxu0 0.0
  %692 = vmatpush.msra.mxu0 %v623
  %693 = vmatmul.f32.gmra.mxu0 %v675
  %v694 = vpop.f32.mrf.mxu0
  %v695 = vadd.f32 0.0, %v694
  %696 = vdwg.mxu0
  %v697 = vadd.f32 %v651, %v695
  %v698 = vxor.u32 %v697, 2147483648
  %v699 = vmul.f32 %v698, 1.442695
  %v700 = vpow.pop %v699
  %v701 = vadd.f32 %v700, 1.0
  %v702 = vrcp.pop %v701
  %v703 = vmul.f32 %v701, %v702
  %v704 = vsub.f32 1.0, %v703
  %v705 = vmul.f32 %v702, %v704
  %v706 = vadd.f32 %v702, %v705
  %vm707 = vweird.f32 %v701
  %vm708 = vweird.f32 %v702
  %vm709 = vmor %vm707, %vm708
  %v710 = vsel %vm709, %v702, %v706
  %v711 = vand.u32 2147483647, %v701
  %vm712 = vcmp.eq.f32.partialorder %v711, 8.507059e+37
  %v713 = vand.u32 %v701, 2147483648
  %v714 = vor.u32 1.1754944e-38, %v713
  %v715 = vsel %vm712, %v714, %v710
  %v716 = vmul.f32 1.0, %v715
  %v717 = vtanh.pop %v697
  %v718 = vmul.f32 %v716, 0.0
  %720 = vrot.lane.b32.xlu0 %v717, 112
  %v721 = vpop.permute.xlu0 %720
  %v723 = vmul.f32 %v716, %v721
  %725 = vrot.lane.b32.xlu0 %v723, 8
  %v726 = vpop.permute.xlu0 %725
  %v728 = vadd.f32 %v718, %v726
  %v729 = vtanh.pop %v728
  %731 = vrot.lane.b32.xlu0 %v729, 16
  %v732 = vpop.permute.xlu0 %731
  %v734 = vmul.f32 %v716, %v732
  %736 = vrot.lane.b32.xlu0 %v734, 104
  %v737 = vpop.permute.xlu0 %736
  %v738 = vsel %vm674, %v737, 0
  %740 = vmatpush.msra.mxu0 0.0
  %741 = vmatpush.msra.mxu0 0.0
  %742 = vmatpush.msra.mxu0 0.0
  %743 = vmatpush.msra.mxu0 0.0
  %744 = vmatpush.msra.mxu0 0.0
  %745 = vmatpush.msra.mxu0 0.0
  %746 = vmatpush.msra.mxu0 0.0
  %747 = vmatpush.msra.mxu0 0.0
  %748 = vmatpush.msra.mxu0 0.0
  %749 = vmatpush.msra.mxu0 0.0
  %750 = vmatpush.msra.mxu0 0.0
  %751 = vmatpush.msra.mxu0 0.0
  %752 = vmatpush.msra.mxu0 0.0
  %753 = vmatpush.msra.mxu0 0.0
  %754 = vmatpush.msra.mxu0 0.0
  %755 = vmatpush.msra.mxu0 %v623
  %756 = vmatmul.f32.gmra.mxu0 %v738
  %v757 = vpop.f32.mrf.mxu0
  %v758 = vadd.f32 0.0, %v757
  %759 = vdwg.mxu0
  %v760 = vadd.f32 %v654, %v758
  %v761 = vxor.u32 %v760, 2147483648
  %v762 = vmul.f32 %v761, 1.442695
  %v763 = vpow.pop %v762
  %v764 = vadd.f32 %v763, 1.0
  %v765 = vrcp.pop %v764
  %v766 = vmul.f32 %v764, %v765
  %v767 = vsub.f32 1.0, %v766
  %v768 = vmul.f32 %v765, %v767
  %v769 = vadd.f32 %v765, %v768
  %vm770 = vweird.f32 %v764
  %vm771 = vweird.f32 %v765
  %vm772 = vmor %vm770, %vm771
  %v773 = vsel %vm772, %v765, %v769
  %v774 = vand.u32 2147483647, %v764
  %vm775 = vcmp.eq.f32.partialorder %v774, 8.507059e+37
  %v776 = vand.u32 %v764, 2147483648
  %v777 = vor.u32 1.1754944e-38, %v776
  %v778 = vsel %vm775, %v777, %v773
  %v779 = vmul.f32 1.0, %v778
  %v780 = vtanh.pop %v760
  %v781 = vmul.f32 %v779, %v728
  %783 = vrot.lane.b32.xlu0 %v780, 112
  %v784 = vpop.permute.xlu0 %783
  %v786 = vmul.f32 %v779, %v784
  %788 = vrot.lane.b32.xlu0 %v786, 8
  %v789 = vpop.permute.xlu0 %788
  %v791 = vadd.f32 %v781, %v789
  %v792 = vtanh.pop %v791
  %794 = vrot.lane.b32.xlu0 %v792, 16
  %v795 = vpop.permute.xlu0 %794
  %v797 = vmul.f32 %v779, %v795
  %799 = vrot.lane.b32.xlu0 %v797, 104
  %v800 = vpop.permute.xlu0 %799
  %v801 = vsel %vm674, %v800, 0
  %803 = vmatpush.msra.mxu0 0.0
  %804 = vmatpush.msra.mxu0 0.0
  %805 = vmatpush.msra.mxu0 0.0
  %806 = vmatpush.msra.mxu0 0.0
  %807 = vmatpush.msra.mxu0 0.0
  %808 = vmatpush.msra.mxu0 0.0
  %809 = vmatpush.msra.mxu0 0.0
  %810 = vmatpush.msra.mxu0 0.0
  %811 = vmatpush.msra.mxu0 0.0
  %812 = vmatpush.msra.mxu0 0.0
  %813 = vmatpush.msra.mxu0 0.0
  %814 = vmatpush.msra.mxu0 0.0
  %815 = vmatpush.msra.mxu0 0.0
  %816 = vmatpush.msra.mxu0 0.0
  %817 = vmatpush.msra.mxu0 0.0
  %818 = vmatpush.msra.mxu0 %v623
  %819 = vmatmul.f32.gmra.mxu0 %v801
  %v820 = vpop.f32.mrf.mxu0
  %v821 = vadd.f32 0.0, %v820
  %822 = vdwg.mxu0
  %v823 = vadd.f32 %v657, %v821
  %v824 = vxor.u32 %v823, 2147483648
  %v825 = vmul.f32 %v824, 1.442695
  %v826 = vpow.pop %v825
  %v827 = vadd.f32 %v826, 1.0
  %v828 = vrcp.pop %v827
  %v829 = vmul.f32 %v827, %v828
  %v830 = vsub.f32 1.0, %v829
  %v831 = vmul.f32 %v828, %v830
  %v832 = vadd.f32 %v828, %v831
  %vm833 = vweird.f32 %v827
  %vm834 = vweird.f32 %v828
  %vm835 = vmor %vm833, %vm834
  %v836 = vsel %vm835, %v828, %v832
  %v837 = vand.u32 2147483647, %v827
  %vm838 = vcmp.eq.f32.partialorder %v837, 8.507059e+37
  %v839 = vand.u32 %v827, 2147483648
  %v840 = vor.u32 1.1754944e-38, %v839
  %v841 = vsel %vm838, %v840, %v836
  %v842 = vmul.f32 1.0, %v841
  %v843 = vtanh.pop %v823
  %v844 = vmul.f32 %v842, %v791
  %846 = vrot.lane.b32.xlu0 %v843, 112
  %v847 = vpop.permute.xlu0 %846
  %v849 = vmul.f32 %v842, %v847
  %851 = vrot.lane.b32.xlu0 %v849, 8
  %v852 = vpop.permute.xlu0 %851
  %v854 = vadd.f32 %v844, %v852
  %v855 = vtanh.pop %v854
  %857 = vrot.lane.b32.xlu0 %v855, 16
  %v858 = vpop.permute.xlu0 %857
  %v860 = vmul.f32 %v842, %v858
  %862 = vrot.lane.b32.xlu0 %v860, 104
  %v863 = vpop.permute.xlu0 %862
  %v864 = vsel %vm674, %v863, 0
  %866 = vmatpush.msra.mxu0 0.0
  %867 = vmatpush.msra.mxu0 0.0
  %868 = vmatpush.msra.mxu0 0.0
  %869 = vmatpush.msra.mxu0 0.0
  %870 = vmatpush.msra.mxu0 0.0
  %871 = vmatpush.msra.mxu0 0.0
  %872 = vmatpush.msra.mxu0 0.0
  %873 = vmatpush.msra.mxu0 0.0
  %874 = vmatpush.msra.mxu0 0.0
  %875 = vmatpush.msra.mxu0 0.0
  %876 = vmatpush.msra.mxu0 0.0
  %877 = vmatpush.msra.mxu0 0.0
  %878 = vmatpush.msra.mxu0 0.0
  %879 = vmatpush.msra.mxu0 0.0
  %880 = vmatpush.msra.mxu0 0.0
  %881 = vmatpush.msra.mxu0 %v623
  %882 = vmatmul.f32.gmra.mxu0 %v864
  %v883 = vpop.f32.mrf.mxu0
  %v884 = vadd.f32 0.0, %v883
  %885 = vdwg.mxu0
  %v886 = vadd.f32 %v660, %v884
  %v887 = vxor.u32 %v886, 2147483648
  %v888 = vmul.f32 %v887, 1.442695
  %v889 = vpow.pop %v888
  %v890 = vadd.f32 %v889, 1.0
  %v891 = vrcp.pop %v890
  %v892 = vmul.f32 %v890, %v891
  %v893 = vsub.f32 1.0, %v892
  %v894 = vmul.f32 %v891, %v893
  %v895 = vadd.f32 %v891, %v894
  %vm896 = vweird.f32 %v890
  %vm897 = vweird.f32 %v891
  %vm898 = vmor %vm896, %vm897
  %v899 = vsel %vm898, %v891, %v895
  %v900 = vand.u32 2147483647, %v890
  %vm901 = vcmp.eq.f32.partialorder %v900, 8.507059e+37
  %v902 = vand.u32 %v890, 2147483648
  %v903 = vor.u32 1.1754944e-38, %v902
  %v904 = vsel %vm901, %v903, %v899
  %v905 = vmul.f32 1.0, %v904
  %v906 = vtanh.pop %v886
  %v907 = vmul.f32 %v905, %v854
  %909 = vrot.lane.b32.xlu0 %v906, 112
  %v910 = vpop.permute.xlu0 %909
  %v912 = vmul.f32 %v905, %v910
  %914 = vrot.lane.b32.xlu0 %v912, 8
  %v915 = vpop.permute.xlu0 %914
  %v917 = vadd.f32 %v907, %v915
  %v918 = vtanh.pop %v917
  %920 = vrot.lane.b32.xlu0 %v918, 16
  %v921 = vpop.permute.xlu0 %920
  %v923 = vmul.f32 %v905, %v921
  %925 = vrot.lane.b32.xlu0 %v923, 104
  %v926 = vpop.permute.xlu0 %925
  %v927 = vsel %vm674, %v926, 0
  %929 = vmatpush.msra.mxu0 0.0
  %930 = vmatpush.msra.mxu0 0.0
  %931 = vmatpush.msra.mxu0 0.0
  %932 = vmatpush.msra.mxu0 0.0
  %933 = vmatpush.msra.mxu0 0.0
  %934 = vmatpush.msra.mxu0 0.0
  %935 = vmatpush.msra.mxu0 0.0
  %936 = vmatpush.msra.mxu0 0.0
  %937 = vmatpush.msra.mxu0 0.0
  %938 = vmatpush.msra.mxu0 0.0
  %939 = vmatpush.msra.mxu0 0.0
  %940 = vmatpush.msra.mxu0 0.0
  %941 = vmatpush.msra.mxu0 0.0
  %942 = vmatpush.msra.mxu0 0.0
  %943 = vmatpush.msra.mxu0 0.0
  %944 = vmatpush.msra.mxu0 %v623
  %945 = vmatmul.f32.gmra.mxu0 %v927
  %v946 = vpop.f32.mrf.mxu0
  %v947 = vadd.f32 0.0, %v946
  %948 = vdwg.mxu0
  %v949 = vadd.f32 %v663, %v947
  %v950 = vxor.u32 %v949, 2147483648
  %v951 = vmul.f32 %v950, 1.442695
  %v952 = vpow.pop %v951
  %v953 = vadd.f32 %v952, 1.0
  %v954 = vrcp.pop %v953
  %v955 = vmul.f32 %v953, %v954
  %v956 = vsub.f32 1.0, %v955
  %v957 = vmul.f32 %v954, %v956
  %v958 = vadd.f32 %v954, %v957
  %vm959 = vweird.f32 %v953
  %vm960 = vweird.f32 %v954
  %vm961 = vmor %vm959, %vm960
  %v962 = vsel %vm961, %v954, %v958
  %v963 = vand.u32 2147483647, %v953
  %vm964 = vcmp.eq.f32.partialorder %v963, 8.507059e+37
  %v965 = vand.u32 %v953, 2147483648
  %v966 = vor.u32 1.1754944e-38, %v965
  %v967 = vsel %vm964, %v966, %v962
  %v968 = vmul.f32 1.0, %v967
  %v969 = vtanh.pop %v949
  %v970 = vmul.f32 %v968, %v917
  %972 = vrot.lane.b32.xlu0 %v969, 112
  %v973 = vpop.permute.xlu0 %972
  %v975 = vmul.f32 %v968, %v973
  %977 = vrot.lane.b32.xlu0 %v975, 8
  %v978 = vpop.permute.xlu0 %977
  %v980 = vadd.f32 %v970, %v978
  %v981 = vtanh.pop %v980
  %983 = vrot.lane.b32.xlu0 %v981, 16
  %v984 = vpop.permute.xlu0 %983
  %v986 = vmul.f32 %v968, %v984
  %988 = vrot.lane.b32.xlu0 %v986, 104
  %v989 = vpop.permute.xlu0 %988
  %v990 = vsel %vm674, %v989, 0
  %992 = vmatpush.msra.mxu0 0.0
  %993 = vmatpush.msra.mxu0 0.0
  %994 = vmatpush.msra.mxu0 0.0
  %995 = vmatpush.msra.mxu0 0.0
  %996 = vmatpush.msra.mxu0 0.0
  %997 = vmatpush.msra.mxu0 0.0
  %998 = vmatpush.msra.mxu0 0.0
  %999 = vmatpush.msra.mxu0 0.0
  %1000 = vmatpush.msra.mxu0 0.0
  %1001 = vmatpush.msra.mxu0 0.0
  %1002 = vmatpush.msra.mxu0 0.0
  %1003 = vmatpush.msra.mxu0 0.0
  %1004 = vmatpush.msra.mxu0 0.0
  %1005 = vmatpush.msra.mxu0 0.0
  %1006 = vmatpush.msra.mxu0 0.0
  %1007 = vmatpush.msra.mxu0 %v623
  %1008 = vmatmul.f32.gmra.mxu0 %v990
  %v1009 = vpop.f32.mrf.mxu0
  %v1010 = vadd.f32 0.0, %v1009
  %1011 = vdwg.mxu0
  %v1012 = vadd.f32 %v666, %v1010
  %v1013 = vxor.u32 %v1012, 2147483648
  %v1014 = vmul.f32 %v1013, 1.442695
  %v1015 = vpow.pop %v1014
  %v1016 = vadd.f32 %v1015, 1.0
  %v1017 = vrcp.pop %v1016
  %v1018 = vmul.f32 %v1016, %v1017
  %v1019 = vsub.f32 1.0, %v1018
  %v1020 = vmul.f32 %v1017, %v1019
  %v1021 = vadd.f32 %v1017, %v1020
  %vm1022 = vweird.f32 %v1016
  %vm1023 = vweird.f32 %v1017
  %vm1024 = vmor %vm1022, %vm1023
  %v1025 = vsel %vm1024, %v1017, %v1021
  %v1026 = vand.u32 2147483647, %v1016
  %vm1027 = vcmp.eq.f32.partialorder %v1026, 8.507059e+37
  %v1028 = vand.u32 %v1016, 2147483648
  %v1029 = vor.u32 1.1754944e-38, %v1028
  %v1030 = vsel %vm1027, %v1029, %v1025
  %v1031 = vmul.f32 1.0, %v1030
  %v1032 = vtanh.pop %v1012
  %v1033 = vmul.f32 %v1031, %v980
  %1035 = vrot.lane.b32.xlu0 %v1032, 112
  %v1036 = vpop.permute.xlu0 %1035
  %v1038 = vmul.f32 %v1031, %v1036
  %1040 = vrot.lane.b32.xlu0 %v1038, 8
  %v1041 = vpop.permute.xlu0 %1040
  %v1043 = vadd.f32 %v1033, %v1041
  %v1044 = vtanh.pop %v1043
  %1046 = vrot.lane.b32.xlu0 %v1044, 16
  %v1047 = vpop.permute.xlu0 %1046
  %v1049 = vmul.f32 %v1031, %v1047
  %1051 = vrot.lane.b32.xlu0 %v1049, 104
  %v1052 = vpop.permute.xlu0 %1051
  %v1053 = vsel %vm674, %v1052, 0
  %1055 = vmatpush.msra.mxu0 0.0
  %1056 = vmatpush.msra.mxu0 0.0
  %1057 = vmatpush.msra.mxu0 0.0
  %1058 = vmatpush.msra.mxu0 0.0
  %1059 = vmatpush.msra.mxu0 0.0
  %1060 = vmatpush.msra.mxu0 0.0
  %1061 = vmatpush.msra.mxu0 0.0
  %1062 = vmatpush.msra.mxu0 0.0
  %1063 = vmatpush.msra.mxu0 0.0
  %1064 = vmatpush.msra.mxu0 0.0
  %1065 = vmatpush.msra.mxu0 0.0
  %1066 = vmatpush.msra.mxu0 0.0
  %1067 = vmatpush.msra.mxu0 0.0
  %1068 = vmatpush.msra.mxu0 0.0
  %1069 = vmatpush.msra.mxu0 0.0
  %1070 = vmatpush.msra.mxu0 %v623
  %1071 = vmatmul.f32.gmra.mxu0 %v1053
  %v1072 = vpop.f32.mrf.mxu0
  %v1073 = vadd.f32 0.0, %v1072
  %1074 = vdwg.mxu0
  %v1075 = vadd.f32 %v669, %v1073
  %v1076 = vxor.u32 %v1075, 2147483648
  %v1077 = vmul.f32 %v1076, 1.442695
  %v1078 = vpow.pop %v1077
  %v1079 = vadd.f32 %v1078, 1.0
  %v1080 = vrcp.pop %v1079
  %v1081 = vmul.f32 %v1079, %v1080
  %v1082 = vsub.f32 1.0, %v1081
  %v1083 = vmul.f32 %v1080, %v1082
  %v1084 = vadd.f32 %v1080, %v1083
  %vm1085 = vweird.f32 %v1079
  %vm1086 = vweird.f32 %v1080
  %vm1087 = vmor %vm1085, %vm1086
  %v1088 = vsel %vm1087, %v1080, %v1084
  %v1089 = vand.u32 2147483647, %v1079
  %vm1090 = vcmp.eq.f32.partialorder %v1089, 8.507059e+37
  %v1091 = vand.u32 %v1079, 2147483648
  %v1092 = vor.u32 1.1754944e-38, %v1091
  %v1093 = vsel %vm1090, %v1092, %v1088
  %v1094 = vmul.f32 1.0, %v1093
  %v1095 = vtanh.pop %v1075
  %v1096 = vmul.f32 %v1094, %v1043
  %1098 = vrot.lane.b32.xlu0 %v1095, 112
  %v1099 = vpop.permute.xlu0 %1098
  %v1101 = vmul.f32 %v1094, %v1099
  %1103 = vrot.lane.b32.xlu0 %v1101, 8
  %v1104 = vpop.permute.xlu0 %1103
  %v1106 = vadd.f32 %v1096, %v1104
  %v1107 = vtanh.pop %v1106
  %1109 = vrot.lane.b32.xlu0 %v1107, 16
  %v1110 = vpop.permute.xlu0 %1109
  %v1112 = vmul.f32 %v1094, %v1110
  %1114 = vrot.lane.b32.xlu0 %v1112, 104
  %v1115 = vpop.permute.xlu0 %1114
  %v1116 = vsel %vm674, %v1115, 0
  %1118 = vmatpush.msra.mxu0 0.0
  %1119 = vmatpush.msra.mxu0 0.0
  %1120 = vmatpush.msra.mxu0 0.0
  %1121 = vmatpush.msra.mxu0 0.0
  %1122 = vmatpush.msra.mxu0 0.0
  %1123 = vmatpush.msra.mxu0 0.0
  %1124 = vmatpush.msra.mxu0 0.0
  %1125 = vmatpush.msra.mxu0 0.0
  %1126 = vmatpush.msra.mxu0 0.0
  %1127 = vmatpush.msra.mxu0 0.0
  %1128 = vmatpush.msra.mxu0 0.0
  %1129 = vmatpush.msra.mxu0 0.0
  %1130 = vmatpush.msra.mxu0 0.0
  %1131 = vmatpush.msra.mxu0 0.0
  %1132 = vmatpush.msra.mxu0 0.0
  %1133 = vmatpush.msra.mxu0 %v623
  %1134 = vmatmul.f32.gmra.mxu0 %v1116
  %v1135 = vpop.f32.mrf.mxu0
  %v1136 = vadd.f32 0.0, %v1135
  %1137 = vdwg.mxu0
  %v1138 = vadd.f32 %v672, %v1136
  %v1139 = vxor.u32 %v1138, 2147483648
  %v1140 = vmul.f32 %v1139, 1.442695
  %v1141 = vpow.pop %v1140
  %v1142 = vadd.f32 %v1141, 1.0
  %v1143 = vrcp.pop %v1142
  %v1144 = vmul.f32 %v1142, %v1143
  %v1145 = vsub.f32 1.0, %v1144
  %v1146 = vmul.f32 %v1143, %v1145
  %v1147 = vadd.f32 %v1143, %v1146
  %vm1148 = vweird.f32 %v1142
  %vm1149 = vweird.f32 %v1143
  %vm1150 = vmor %vm1148, %vm1149
  %v1151 = vsel %vm1150, %v1143, %v1147
  %v1152 = vand.u32 2147483647, %v1142
  %vm1153 = vcmp.eq.f32.partialorder %v1152, 8.507059e+37
  %v1154 = vand.u32 %v1142, 2147483648
  %v1155 = vor.u32 1.1754944e-38, %v1154
  %v1156 = vsel %vm1153, %v1155, %v1151
  %v1157 = vmul.f32 1.0, %v1156
  %v1158 = vtanh.pop %v1138
  %v1159 = vmul.f32 %v1157, %v1106
  %1161 = vrot.lane.b32.xlu0 %v1158, 112
  %v1162 = vpop.permute.xlu0 %1161
  %v1164 = vmul.f32 %v1157, %v1162
  %1166 = vrot.lane.b32.xlu0 %v1164, 8
  %v1167 = vpop.permute.xlu0 %1166
  %v1169 = vadd.f32 %v1159, %v1167
  %v1170 = vtanh.pop %v1169
  %1172 = vrot.lane.b32.xlu0 %v1170, 16
  %v1173 = vpop.permute.xlu0 %1172
  %v1175 = vmul.f32 %v1157, %v1173
  %1177 = vrot.lane.b32.xlu0 %v797, 112
  %v1178 = vpop.permute.xlu0 %1177
  %1180 = vrot.lane.b32.xlu0 %v860, 120
  %v1181 = vpop.permute.xlu0 %1180
  %1183 = vrot.lane.b32.xlu0 %v986, 8
  %v1184 = vpop.permute.xlu0 %1183
  %1186 = vrot.lane.b32.xlu0 %v1049, 16
  %v1187 = vpop.permute.xlu0 %1186
  %1189 = vrot.lane.b32.xlu0 %v1112, 24
  %v1190 = vpop.permute.xlu0 %1189
  %1193 = vrot.lane.b32.xlu0 %v1175, 32
  %v1194 = vpop.permute.xlu0 %1193
  %v1196 = vsel %vm674, %v737, %v1178
  %v1197 = vsel %vm50, %v1196, %v1181
  %vm1198 = vcmask 195584
  %v1199 = vsel %vm1198, %v1197, %v923
  %v1200 = vsel %vm116, %v1199, %v1184
  %vm1201 = vcmask 326656
  %v1202 = vsel %vm1201, %v1200, %v1187
  %vm1203 = vcmask 392192
  %v1204 = vsel %vm1203, %v1202, %v1190
  %vm1205 = vcmask 457728
  %v1206 = vsel %vm1205, %v1204, %v1194
  %v1207 = vld [vmem:[%s7] sm:$0xff]
  %v1208 = vld [vmem:[%s7 + $0x8] sm:$0xff]
  %v1209 = vld [vmem:[%s7 + $0x10] sm:$0xff]
  %v1210 = vld [vmem:[%s7 + $0x18] sm:$0xff]
  %v1211 = vld [vmem:[%s7 + $0x20] sm:$0xff]
  %v1212 = vld [vmem:[%s7 + $0x28] sm:$0xff]
  %v1213 = vld [vmem:[%s7 + $0x30] sm:$0xff]
  %v1214 = vld [vmem:[%s7 + $0x38] sm:$0xff]
  %v1215 = vld [vmem:[%s8] sm:$0x1]
  %v1217 = vperm.slane %v1215, 0
  %vm1219 = vcmask 523264
  %v1221 = vsel %vm1219, %v1206, 0
  %1223 = vmatpush.msra.mxu0 0.0
  %1224 = vmatpush.msra.mxu0 0.0
  %1225 = vmatpush.msra.mxu0 0.0
  %1226 = vmatpush.msra.mxu0 0.0
  %1227 = vmatpush.msra.mxu0 0.0
  %1228 = vmatpush.msra.mxu0 0.0
  %1229 = vmatpush.msra.mxu0 0.0
  %1230 = vmatpush.msra.mxu0 0.0
  %1231 = vmatpush.msra.mxu0 %v1214
  %1232 = vmatpush.msra.mxu0 %v1213
  %1233 = vmatpush.msra.mxu0 %v1212
  %1234 = vmatpush.msra.mxu0 %v1211
  %1235 = vmatpush.msra.mxu0 %v1210
  %1236 = vmatpush.msra.mxu0 %v1209
  %1237 = vmatpush.msra.mxu0 %v1208
  %1238 = vmatpush.msra.mxu0 %v1207
  %1239 = vmatmul.f32.gmra.mxu0 %v1221
  %v1240 = vpop.f32.mrf.mxu0
  %v1241 = vadd.f32 %v1217, %v1240
  %1242 = vdwg.mxu0
  %1243 = vst.msk [vmem:[%s9] sm:$0xff] %vm116, %v1241
  // Predicated region
  $region38: #{lstm_forward.1} parent=0 // pred_check
    _
  $region39: #{lstm_forward.1} parent=0 // pred_check_branch
    %1245 = sbr.rel (0) target = $region41
  $region40: #{lstm_forward.1} parent=0 // pred_region
    _
  $region41: #{lstm_forward.1} parent=0 // pred_fallthru
    _
  // Predicated region
  $region42: #{lstm_forward.1} parent=0 // pred_check
    _
  $region43: #{lstm_forward.1} parent=0 // pred_check_branch
    %1247 = sbr.rel (0) target = $region45
  $region44: #{lstm_forward.1} parent=0 // pred_region
    _
  $region45: #{lstm_forward.1} parent=0 // pred_fallthru
    _

</llo_original>
